<compile_context>
chip_gen: v7x
topology: tpu7x:2x2x1
jax: 0.10.0
libtpu: 0.0.40
codegen_flags: <defaults>
</compile_context>

<pallas_src>
import functools

import numpy as np
import jax
import jax.numpy as jnp
from jax.experimental import pallas as pl
from jax.experimental.pallas import tpu as pltpu

# ---- module hyperparameters (defaults of the torch MFCC module) -------------
SAMPLE_RATE = 16000
WINDOW_SIZE_MS = 0.025
HOP_LENGTH_MS = 0.01
N_MELS = 40
N_MFCC = 13

WINDOW_SIZE = int(np.floor(WINDOW_SIZE_MS * SAMPLE_RATE))   # 400
HOP_LENGTH = int(np.floor(HOP_LENGTH_MS * SAMPLE_RATE))     # 160
FFT_SIZE = 2
while FFT_SIZE < WINDOW_SIZE:
    FFT_SIZE *= 2                                            # 512
N_FREQ_FULL = FFT_SIZE // 2 + 1                              # 257
N_FREQ = FFT_SIZE // 2                                       # 256 (Nyquist col is 0)
N_OUT = 3 * N_MFCC                                           # 39 (delta=True)
N_OUT_PAD = 128                                              # lane-dense output

ROWS_PER_FRAME = 3            # 401-sample extended frame spans 3 hop rows of 160
K_PAD = ROWS_PER_FRAME * HOP_LENGTH                          # 480
TAIL_ROWS = 16                # extra rows needed past a tile (2) rounded to 16
TF_MAX = 512                  # frame-tile size cap (multiple of 16)


def _round_up(x, m):
    return ((x + m - 1) // m) * m


def _cdiv(a, b):
    return -(-a // b)


# ---- deterministic constant construction (plain numpy, float64) -------------
def _hamming_window(n):
    # torch.hamming_window(n) (periodic=True): 0.54 - 0.46*cos(2*pi*k/n)
    k = np.arange(n)
    return (0.54 - 0.46 * np.cos(2.0 * np.pi * k / n)).astype(np.float64)


def _windowed_preemph_rdft_basis():
    """(480, 512) basis: ext-frame(401 raw samples, zero-padded to 480) @ basis
    == rfft(preemphasis(frame) * hamming, n=512)[:256] as [re | im].

    ext-frame m of frame f is x_z[f*HOP + m], m = 0..400, where x_z is the
    waveform with one zero prepended (so frame 0's preemphasis x_pre[0] = x[0]
    is exact).  Preemphasis p[n] = ext[n+1] - 0.97*ext[n] is folded in.
    """
    win = _hamming_window(WINDOW_SIZE)[:, None]                        # (400, 1)
    n = np.arange(WINDOW_SIZE)[:, None].astype(np.float64)
    k = np.arange(N_FREQ)[None, :].astype(np.float64)
    ang = 2.0 * np.pi * n * k / FFT_SIZE
    base = np.concatenate([np.cos(ang) * win, -np.sin(ang) * win], axis=1)  # (400, 512)
    A = np.zeros((WINDOW_SIZE + 1, 2 * N_FREQ), dtype=np.float64)      # (401, 512)
    A[1:, :] += base
    A[:-1, :] -= 0.97 * base
    A_pad = np.zeros((K_PAD, 2 * N_FREQ), dtype=np.float64)            # (480, 512)
    A_pad[:WINDOW_SIZE + 1] = A
    return A_pad


def _filterbank():
    def freq_to_mel(f):
        return 2595 * np.log10(1 + f / 700)

    def mel_to_freq(m):
        return 700 * (10 ** (m / 2595) - 1)

    high_freq_mel = freq_to_mel(SAMPLE_RATE / 2)
    mel_points = np.linspace(0, high_freq_mel, N_MELS + 2)
    hz_points = mel_to_freq(mel_points)
    bins = np.floor((FFT_SIZE + 1) * hz_points / SAMPLE_RATE)
    fbank = np.zeros((N_MELS, N_FREQ_FULL), dtype=np.float64)
    for m in range(1, N_MELS + 1):
        f_m_minus = int(bins[m - 1])
        f_m = int(bins[m])
        f_m_plus = int(bins[m + 1])
        up = f_m - f_m_minus
        down = f_m_plus - f_m
        for k in range(f_m_minus, f_m):
            fbank[m - 1, k] = (k - bins[m - 1]) / up
        for k in range(f_m, f_m_plus):
            fbank[m - 1, k] = (bins[m + 1] - k) / down
    return fbank.astype(np.float32)                                    # (40, 257)


def _dct_matrix(n):
    # DCT-II, norm='ortho' (scipy convention):  mfcc = logmel @ D.T
    k = np.arange(n)[:, None].astype(np.float64)
    m = np.arange(n)[None, :].astype(np.float64)
    d = 2.0 * np.cos(np.pi * (2 * m + 1) * k / (2 * n))
    scale = np.full((n, 1), np.sqrt(1.0 / (2 * n)))
    scale[0, 0] = np.sqrt(1.0 / (4 * n))
    return d * scale                                                   # (n, n) f64


def _delta_matrix(n):
    # The torch module applies Delta along the DCT-coefficient axis (dim=2 of
    # (B, F, n_mels)); this matches that exactly:  delta = x @ M.
    M = np.zeros((n, n), dtype=np.float64)
    for i in range(1, n - 1):
        M[i + 1, i] = 0.5
        M[i - 1, i] = -0.5
    return M


def _dct_combine_matrix():
    # out = logmel @ (D.T @ C) == concat(mfcc[:, :13], delta[:, :13], d2[:, :13])
    D = _dct_matrix(N_MELS)
    M = _delta_matrix(N_MELS)
    I = np.eye(N_MELS, dtype=np.float64)
    C = np.zeros((N_MELS, N_OUT), dtype=np.float64)
    C[:, 0:N_MFCC] = I[:, :N_MFCC]
    C[:, N_MFCC:2 * N_MFCC] = M[:, :N_MFCC]
    C[:, 2 * N_MFCC:3 * N_MFCC] = (M @ M)[:, :N_MFCC]
    return (D.T @ C).astype(np.float32)                                # (40, 39)


# ---- Pallas kernel: one (batch, frame-tile) block per grid step --------------
def _mfcc_kernel(rows_ref, tail_ref, basis_ref, fb_ref, dc_ref, o_ref,
                 rows_sc, *, tf):
    # rows_ref : (1, TF, 160)  f32   hop rows [t*TF, t*TF+TF)
    # tail_ref : (1, 16, 160)  f32   hop rows [t*TF+TF, t*TF+TF+16)
    # basis_ref: (480, 512)    bf16  windowed+preemphasized rDFT basis chunks
    # fb_ref   : (256, 128)    bf16  mel filterbank.T (lane-padded)
    # dc_ref   : (128, 128)    f32   fused DCT+delta+concat matrix (padded)
    # o_ref    : (1, TF, 128)  f32
    # rows_sc  : (TF+16, 160)  f32   VMEM scratch (main + tail, contiguous)
    rows_sc[0:tf, :] = rows_ref[0]
    rows_sc[tf:tf + TAIL_ROWS, :] = tail_ref[0]

    # Windowed rDFT with preemphasis folded into the basis:
    # frame f spans hop rows f, f+1, f+2 -> three bf16 MXU matmuls, f32 acc.
    spec = jnp.dot(rows_sc[0:tf, :].astype(jnp.bfloat16),
                   basis_ref[0:HOP_LENGTH, :],
                   preferred_element_type=jnp.float32)
    spec += jnp.dot(rows_sc[1:tf + 1, :].astype(jnp.bfloat16),
                    basis_ref[HOP_LENGTH:2 * HOP_LENGTH, :],
                    preferred_element_type=jnp.float32)
    spec += jnp.dot(rows_sc[2:tf + 2, :].astype(jnp.bfloat16),
                    basis_ref[2 * HOP_LENGTH:3 * HOP_LENGTH, :],
                    preferred_element_type=jnp.float32)                # (TF, 512)

    re = spec[:, :N_FREQ]
    im = spec[:, N_FREQ:]
    mag = jnp.sqrt(re * re + im * im)                                  # (TF, 256)

    mel = jnp.dot(mag.astype(jnp.bfloat16), fb_ref[...],
                  preferred_element_type=jnp.float32)                  # (TF, 128)
    logmel = jnp.log(mel + 1e-20)
    out = jnp.dot(logmel, dc_ref[...],
                  preferred_element_type=jnp.float32)                  # (TF, 128)
    o_ref[0] = out.astype(o_ref.dtype)


def mfcc_forward(x):
    """x: (B, T) float32 waveform -> (B, num_frames, 3*N_MFCC) float32."""
    x = x.astype(jnp.float32)
    B, T = x.shape
    num_frames = (T - WINDOW_SIZE) // HOP_LENGTH + 1

    # --- frame-tile size: large tiles (low per-step overhead), >=2 grid steps
    #     when possible so both v7x TensorCores get work.
    TF = min(TF_MAX, _round_up(num_frames, TAIL_ROWS))
    if B * _cdiv(num_frames, TF) < 2 and num_frames > TAIL_ROWS:
        TF = min(TF, _round_up(_cdiv(num_frames, 2), TAIL_ROWS))
    n_tiles = _cdiv(num_frames, TF)
    F_pad = n_tiles * TF

    # --- in-kernel framing input: zero-prepended waveform as 160-sample rows.
    # Row r holds x_z[r*160 : (r+1)*160]; frame f needs rows f, f+1, f+2.
    R_pad = F_pad + TAIL_ROWS
    pad_right = R_pad * HOP_LENGTH - (T + 1)
    x_rows = jnp.pad(x, ((0, 0), (1, pad_right))).reshape(B, R_pad, HOP_LENGTH)

    # --- constants (window + preemphasis folded into the bf16 DFT basis) ---
    basis = jnp.asarray(_windowed_preemph_rdft_basis(), dtype=jnp.bfloat16)  # (480, 512)
    fb_full = _filterbank()                                                  # (40, 257)
    # Nyquist truncation is only valid because its filterbank column is zero.
    assert np.all(fb_full[:, N_FREQ:] == 0.0), (
        "Nyquist filterbank column nonzero; cannot truncate 257 -> 256 bins")
    fb_pad = np.zeros((N_FREQ, N_OUT_PAD), dtype=np.float32)
    fb_pad[:, :N_MELS] = fb_full[:, :N_FREQ].T
    fbank_t = jnp.asarray(fb_pad, dtype=jnp.bfloat16)                        # (256, 128)
    dc_pad = np.zeros((N_OUT_PAD, N_OUT_PAD), dtype=np.float32)
    dc_pad[:N_MELS, :N_OUT] = _dct_combine_matrix()
    dct_comb = jnp.asarray(dc_pad)                                           # (128, 128)

    tail_stride = TF // TAIL_ROWS   # tail block index per frame tile

    out = pl.pallas_call(
        functools.partial(_mfcc_kernel, tf=TF),
        out_shape=jax.ShapeDtypeStruct((B, F_pad, N_OUT_PAD), jnp.float32),
        grid_spec=pltpu.PrefetchScalarGridSpec(
            num_scalar_prefetch=0,
            grid=(B, n_tiles),
            in_specs=[
                # main rows of this tile
                pl.BlockSpec((1, TF, HOP_LENGTH), lambda b, t: (b, t, 0)),
                # 16-row tail (same array, next block of rows)
                pl.BlockSpec((1, TAIL_ROWS, HOP_LENGTH),
                             lambda b, t: (b, (t + 1) * tail_stride, 0)),
                # resident constants (block index constant -> fetched once)
                pl.BlockSpec((K_PAD, 2 * N_FREQ), lambda b, t: (0, 0)),
                pl.BlockSpec((N_FREQ, N_OUT_PAD), lambda b, t: (0, 0)),
                pl.BlockSpec((N_OUT_PAD, N_OUT_PAD), lambda b, t: (0, 0)),
            ],
            out_specs=pl.BlockSpec((1, TF, N_OUT_PAD), lambda b, t: (b, t, 0)),
            scratch_shapes=[
                pltpu.VMEM((TF + TAIL_ROWS, HOP_LENGTH), jnp.float32)],
        ),
        compiler_params=pltpu.CompilerParams(
            dimension_semantics=("parallel", "parallel")),
    )(x_rows, x_rows, basis, fbank_t, dct_comb)

    return out[:, :num_frames, :N_OUT]


# ---- pure-JAX reference (mirrors the torch module literally) -----------------
def mfcc_reference(x):
    x = x.astype(jnp.float32)
    B, T = x.shape
    x_pre = jnp.concatenate([x[:, :1], x[:, 1:] - 0.97 * x[:, :-1]], axis=1)
    F = (T - WINDOW_SIZE) // HOP_LENGTH + 1
    idx = (np.arange(F)[:, None] * HOP_LENGTH + np.arange(WINDOW_SIZE)[None, :])
    win = jnp.asarray(_hamming_window(WINDOW_SIZE).astype(np.float32))
    frames = x_pre[:, idx] * win
    spec = jnp.abs(jnp.fft.rfft(frames, n=FFT_SIZE, axis=2))
    mel = spec @ jnp.asarray(_filterbank().T)
    logmel = jnp.log(mel + 1e-20)
    mfcc = logmel @ jnp.asarray(_dct_matrix(N_MELS).T.astype(np.float32))

    def delta(z):
        d = jnp.zeros_like(z)
        return d.at[:, :, 1:-1].set((z[:, :, 2:] - z[:, :, :-2]) / 2)

    d1 = delta(mfcc)
    d2 = delta(d1)
    return jnp.concatenate(
        [mfcc[..., :N_MFCC], d1[..., :N_MFCC], d2[..., :N_MFCC]], axis=2)


if __name__ == "__main__":
    key = jax.random.PRNGKey(0)
    B = 2
    T = WINDOW_SIZE + HOP_LENGTH * 15      # 2800 samples -> 16 frames
    x = jax.random.normal(key, (B, T), dtype=jnp.float32)

    out = jax.block_until_ready(mfcc_forward(x))
    assert out.shape == (B, 16, N_OUT), out.shape
    assert out.dtype == jnp.float32

    ref = jax.block_until_ready(mfcc_reference(x))
    err = float(jnp.max(jnp.abs(out - ref)))
    assert err < 5e-2, f"max abs error vs reference: {err}"

    print("KERNEL_OK")
</pallas_src>

<mosaic_0001>
module attributes {stable_mosaic.version = 11 : i64} {
  func.func @_mfcc_kernel(%arg0: i32, %arg1: i32, %arg2: memref<1x16x160xf32, #tpu.memory_space<vmem>>, %arg3: memref<1x16x160xf32, #tpu.memory_space<vmem>>, %arg4: memref<480x512xbf16, #tpu.memory_space<vmem>>, %arg5: memref<256x128xbf16, #tpu.memory_space<vmem>>, %arg6: memref<128x128xf32, #tpu.memory_space<vmem>>, %arg7: memref<1x16x128xf32, #tpu.memory_space<vmem>>, %arg8: memref<32x160xf32, #tpu.memory_space<vmem>>) attributes {dimension_semantics = [#tpu.dimension_semantics<parallel>, #tpu.dimension_semantics<parallel>], iteration_bounds = array<i64: 2, 1>, scalar_prefetch = 0 : i64, scratch_operands = 1 : i64, tpu.core_type = #tpu.core_type<tc>, window_params = [{transform_indices = @transform_0, window_bounds = array<i64: 1, 16, 160>}, {transform_indices = @transform_1, window_bounds = array<i64: 1, 16, 160>}, {pipeline_mode = #tpu.pipeline_mode<synchronous>, transform_indices = @transform_2, window_bounds = array<i64: 480, 512>}, {pipeline_mode = #tpu.pipeline_mode<synchronous>, transform_indices = @transform_3, window_bounds = array<i64: 256, 128>}, {pipeline_mode = #tpu.pipeline_mode<synchronous>, transform_indices = @transform_4, window_bounds = array<i64: 128, 128>}, {transform_indices = @transform_5, window_bounds = array<i64: 1, 16, 128>}]} {
    %c0 = arith.constant 0 : index
    %c0_0 = arith.constant 0 : index
    %c0_1 = arith.constant 0 : index
    %0 = vector.load %arg2[%c0, %c0_0, %c0_1] : memref<1x16x160xf32, #tpu.memory_space<vmem>>, vector<1x16x160xf32>
    %1 = vector.shape_cast %0 : vector<1x16x160xf32> to vector<16x160xf32>
    %c0_2 = arith.constant 0 : index
    %c0_3 = arith.constant 0 : index
    %2 = vector.load %arg8[%c0_2, %c0_3] : memref<32x160xf32, #tpu.memory_space<vmem>>, vector<16x160xf32>
    tpu.vector_store %arg8[%c0_2, %c0_3], %1 {strides = array<i32>} : memref<32x160xf32, #tpu.memory_space<vmem>>, vector<16x160xf32>,
    %c0_4 = arith.constant 0 : index
    %c0_5 = arith.constant 0 : index
    %c0_6 = arith.constant 0 : index
    %3 = vector.load %arg3[%c0_4, %c0_5, %c0_6] : memref<1x16x160xf32, #tpu.memory_space<vmem>>, vector<1x16x160xf32>
    %4 = vector.shape_cast %3 : vector<1x16x160xf32> to vector<16x160xf32>
    %c16 = arith.constant 16 : index
    %c0_7 = arith.constant 0 : index
    %5 = vector.load %arg8[%c16, %c0_7] : memref<32x160xf32, #tpu.memory_space<vmem>>, vector<16x160xf32>
    tpu.vector_store %arg8[%c16, %c0_7], %4 {strides = array<i32>} : memref<32x160xf32, #tpu.memory_space<vmem>>, vector<16x160xf32>,
    %c0_8 = arith.constant 0 : index
    %c0_9 = arith.constant 0 : index
    %6 = vector.load %arg8[%c0_8, %c0_9] : memref<32x160xf32, #tpu.memory_space<vmem>>, vector<16x160xf32>
    %7 = arith.truncf %6 : vector<16x160xf32> to vector<16x160xbf16>
    %c0_10 = arith.constant 0 : index
    %c0_11 = arith.constant 0 : index
    %8 = vector.load %arg4[%c0_10, %c0_11] : memref<480x512xbf16, #tpu.memory_space<vmem>>, vector<160x512xbf16>
    %cst = arith.constant dense<0.000000e+00> : vector<16x512xf32>
    %9 = tpu.matmul %7, %8, %cst {dimension_numbers = #tpu.dot_dimension_numbers<[1], [0], [0], [1], [0, 0, 1, 1], [], []>} : vector<16x160xbf16>, vector<160x512xbf16>, vector<16x512xf32> -> vector<16x512xf32>
    %c1 = arith.constant 1 : index
    %c0_12 = arith.constant 0 : index
    %10 = vector.load %arg8[%c1, %c0_12] : memref<32x160xf32, #tpu.memory_space<vmem>>, vector<16x160xf32>
    %11 = arith.truncf %10 : vector<16x160xf32> to vector<16x160xbf16>
    %c160 = arith.constant 160 : index
    %c0_13 = arith.constant 0 : index
    %12 = vector.load %arg4[%c160, %c0_13] : memref<480x512xbf16, #tpu.memory_space<vmem>>, vector<160x512xbf16>
    %cst_14 = arith.constant dense<0.000000e+00> : vector<16x512xf32>
    %13 = tpu.matmul %11, %12, %cst_14 {dimension_numbers = #tpu.dot_dimension_numbers<[1], [0], [0], [1], [0, 0, 1, 1], [], []>} : vector<16x160xbf16>, vector<160x512xbf16>, vector<16x512xf32> -> vector<16x512xf32>
    %14 = arith.addf %9, %13 : vector<16x512xf32>
    %c2 = arith.constant 2 : index
    %c0_15 = arith.constant 0 : index
    %15 = vector.load %arg8[%c2, %c0_15] : memref<32x160xf32, #tpu.memory_space<vmem>>, vector<16x160xf32>
    %16 = arith.truncf %15 : vector<16x160xf32> to vector<16x160xbf16>
    %c320 = arith.constant 320 : index
    %c0_16 = arith.constant 0 : index
    %17 = vector.load %arg4[%c320, %c0_16] : memref<480x512xbf16, #tpu.memory_space<vmem>>, vector<160x512xbf16>
    %cst_17 = arith.constant dense<0.000000e+00> : vector<16x512xf32>
    %18 = tpu.matmul %16, %17, %cst_17 {dimension_numbers = #tpu.dot_dimension_numbers<[1], [0], [0], [1], [0, 0, 1, 1], [], []>} : vector<16x160xbf16>, vector<160x512xbf16>, vector<16x512xf32> -> vector<16x512xf32>
    %19 = arith.addf %14, %18 : vector<16x512xf32>
    %20 = vector.extract_strided_slice %19 {offsets = [0, 0], sizes = [16, 256], strides = [1, 1]} : vector<16x512xf32> to vector<16x256xf32>
    %21 = vector.extract_strided_slice %19 {offsets = [0, 256], sizes = [16, 256], strides = [1, 1]} : vector<16x512xf32> to vector<16x256xf32>
    %22 = arith.mulf %20, %20 : vector<16x256xf32>
    %23 = arith.mulf %21, %21 : vector<16x256xf32>
    %24 = arith.addf %22, %23 : vector<16x256xf32>
    %25 = math.sqrt %24 : vector<16x256xf32>
    %26 = arith.truncf %25 : vector<16x256xf32> to vector<16x256xbf16>
    %c0_18 = arith.constant 0 : index
    %c0_19 = arith.constant 0 : index
    %27 = vector.load %arg5[%c0_18, %c0_19] : memref<256x128xbf16, #tpu.memory_space<vmem>>, vector<256x128xbf16>
    %cst_20 = arith.constant dense<0.000000e+00> : vector<16x128xf32>
    %28 = tpu.matmul %26, %27, %cst_20 {dimension_numbers = #tpu.dot_dimension_numbers<[1], [0], [0], [1], [0, 0, 1, 1], [], []>} : vector<16x256xbf16>, vector<256x128xbf16>, vector<16x128xf32> -> vector<16x128xf32>
    %cst_21 = arith.constant 9.99999968E-21 : f32
    %29 = vector.broadcast %cst_21 : f32 to vector<16x128xf32>
    %30 = arith.addf %28, %29 : vector<16x128xf32>
    %31 = math.log %30 : vector<16x128xf32>
    %c0_22 = arith.constant 0 : index
    %c0_23 = arith.constant 0 : index
    %32 = vector.load %arg6[%c0_22, %c0_23] : memref<128x128xf32, #tpu.memory_space<vmem>>, vector<128x128xf32>
    %cst_24 = arith.constant dense<0.000000e+00> : vector<16x128xf32>
    %33 = tpu.matmul %31, %32, %cst_24 {dimension_numbers = #tpu.dot_dimension_numbers<[1], [0], [0], [1], [0, 0, 1, 1], [], []>} : vector<16x128xf32>, vector<128x128xf32>, vector<16x128xf32> -> vector<16x128xf32>
    %c0_25 = arith.constant 0 : index
    %c0_26 = arith.constant 0 : index
    %c0_27 = arith.constant 0 : index
    %34 = vector.load %arg7[%c0_25, %c0_26, %c0_27] : memref<1x16x128xf32, #tpu.memory_space<vmem>>, vector<1x16x128xf32>
    %35 = vector.shape_cast %34 : vector<1x16x128xf32> to vector<16x128xf32>
    %36 = vector.shape_cast %33 : vector<16x128xf32> to vector<1x16x128xf32>
    tpu.vector_store %arg7[%c0_25, %c0_26, %c0_27], %36 {strides = array<i32>} : memref<1x16x128xf32, #tpu.memory_space<vmem>>, vector<1x16x128xf32>,
    return
  }
  func.func @transform_0(%arg0: i32, %arg1: i32) -> (i32, i32, i32) {
    %c0_i32 = arith.constant 0 : i32
    %c0_i32_0 = arith.constant 0 : i32
    return %arg0, %arg1, %c0_i32 : i32, i32, i32
  }
  func.func @transform_1(%arg0: i32, %arg1: i32) -> (i32, i32, i32) {
    %c1_i32 = arith.constant 1 : i32
    %0 = arith.addi %arg1, %c1_i32 : i32
    %c1_i32_0 = arith.constant 1 : i32
    %1 = arith.muli %0, %c1_i32_0 : i32
    %c0_i32 = arith.constant 0 : i32
    %c0_i32_1 = arith.constant 0 : i32
    return %arg0, %1, %c0_i32 : i32, i32, i32
  }
  func.func @transform_2(%arg0: i32, %arg1: i32) -> (i32, i32) {
    %c0_i32 = arith.constant 0 : i32
    %c0_i32_0 = arith.constant 0 : i32
    %c0_i32_1 = arith.constant 0 : i32
    return %c0_i32, %c0_i32_0 : i32, i32
  }
  func.func @transform_3(%arg0: i32, %arg1: i32) -> (i32, i32) {
    %c0_i32 = arith.constant 0 : i32
    %c0_i32_0 = arith.constant 0 : i32
    %c0_i32_1 = arith.constant 0 : i32
    return %c0_i32, %c0_i32_0 : i32, i32
  }
  func.func @transform_4(%arg0: i32, %arg1: i32) -> (i32, i32) {
    %c0_i32 = arith.constant 0 : i32
    %c0_i32_0 = arith.constant 0 : i32
    %c0_i32_1 = arith.constant 0 : i32
    return %c0_i32, %c0_i32_0 : i32, i32
  }
  func.func @transform_5(%arg0: i32, %arg1: i32) -> (i32, i32, i32) {
    %c0_i32 = arith.constant 0 : i32
    %c0_i32_0 = arith.constant 0 : i32
    return %arg0, %arg1, %c0_i32 : i32, i32, i32
  }
}

</mosaic_0001>

<llo_original>
// kernel: tpu_custom_call.1
$region0: #{tpu_custom_call.1}
  #allocation0 [shape = 'u32[]', space=smem, size = 0x4, offset = 0x4, fixed_abs, tag = 'smem constant byte address 0x4 - core index']
  #allocation1 [shape = 'u32[144,128]{1,0:T(1,128)}', space=vmem, size = 0x12000, scoped, tag = 'internal scratch']
  #allocation2 [shape = 'f32[32,160]{1,0:T(8,128)}', space=vmem, size = 0x8000, scoped, tag = 'scratch operand']
  %s0 = inlined_call_operand.hbm [shape: f32[2,32,160], index: 0, kind: input, shape index: {}]
  %s1 = inlined_call_operand.hbm [shape: f32[2,32,160], index: 1, kind: input, shape index: {}]
  %s2 = inlined_call_operand.hbm [shape: bf16[480,512], index: 2, kind: input, shape index: {}]
  %s3 = inlined_call_operand.hbm [shape: bf16[256,128], index: 3, kind: input, shape index: {}]
  %s4 = inlined_call_operand.hbm [shape: f32[128,128], index: 4, kind: input, shape index: {}]
  %s5 = inlined_call_operand.hbm [shape: f32[2,16,128], index: 5, kind: output, shape index: {}]
  %s6 = sld [smem:[#allocation0]]
  $region73: #{tpu_custom_call.1} parent=0
    _
  %s8 = ssub.s32 1, %s6
  %s9 = scalar_select 0, %s8, %s6
  $region1: #{tpu_custom_call.1} parent=0
    #allocation3 [shape = 'u8[32768]{0}', space=vmem, size = 0x8000, scoped, tag = 'input window, operand 0']
    #allocation4 [shape = 's32[2]{0}', space=sflag, size = 0x8, scoped, tag = 'scoped memory for tpu_custom_call.1']
    #allocation5 [shape = 's32[2]{0}', space=sflag, size = 0x8, scoped, tag = 'scoped memory for tpu_custom_call.1']
    #allocation6 [shape = 'u8[32768]{0}', space=vmem, size = 0x8000, scoped, tag = 'input window, operand 1']
    #allocation7 [shape = 's32[2]{0}', space=sflag, size = 0x8, scoped, tag = 'scoped memory for tpu_custom_call.1']
    #allocation8 [shape = 'u8[491520]{0}', space=vmem, size = 0x78000, scoped, tag = 'input window, operand 2, single buffered']
    #allocation9 [shape = 'u8[65536]{0}', space=vmem, size = 0x10000, scoped, tag = 'input window, operand 3, single buffered']
    #allocation10 [shape = 's32[1]{0}', space=sflag, size = 0x4, scoped, tag = 'scoped memory for tpu_custom_call.1']
    #allocation11 [shape = 'u8[65536]{0}', space=vmem, size = 0x10000, scoped, tag = 'input window, operand 4, single buffered']
    #allocation12 [shape = 'u8[16384]{0}', space=vmem, size = 0x4000, scoped, tag = 'output window, operand 0']
    %10 = vsyncpa [#allocation4], 0
    %s11 = scalar_lea.sflag [#allocation4], 1
    %12 = vsyncpa %s11, 0
    %13 = vsyncpa [#allocation7], 0
    %s14 = scalar_lea.sflag [#allocation7], 1
    %15 = vsyncpa %s14, 0
    %16 = vsyncpa [#allocation10], 0
    %17 = vsyncpa [#allocation5], 0
    %s18 = scalar_lea.sflag [#allocation5], 1
    %19 = vsyncpa %s18, 0
    loop: start=0, step=1, limit=4
    $region2: #{tpu_custom_call.1} parent=1 // loop_pre_header
      _
    $region3: #{tpu_custom_call.1} parent=1 // loop_header
      %s21 = sphi 0, %s25
      %p22 = scmp.ge.s32.totalorder %s21, 4
      %s28 = sphi 0, %s40
      %s29 = sphi 0, %s36
      %s30 = sphi 0, %s28
      %s31 = sphi 0, %s29
      %s32 = sphi 0, %s30
      %s33 = sphi 0, %s31
      %s45 = sphi 0, %s47
      %s48 = sphi 0, %s45
      %s49 = sphi 0, %s48
      %s65 = sphi 0, %s49
      %s75 = sphi 0, %s77
      %s78 = sphi 0, %s75
      %s79 = sphi 0, %s78
      %s95 = sphi 0, %s79
      %s99 = sphi 0, %s99
      %s101 = sphi 0, %s99
      %s102 = sphi 0, %s101
      %s116 = sphi 0, %s102
      %s120 = sphi 0, %s120
      %s122 = sphi 0, %s120
      %s123 = sphi 0, %s122
      %s137 = sphi 0, %s123
      %s141 = sphi 0, %s141
      %s143 = sphi 0, %s141
      %s144 = sphi 0, %s143
      %s158 = sphi 0, %s144
      %s166 = sphi 0, %s168
      %s169 = sphi 0, %s166
      %s170 = sphi 0, %s169
      %s186 = sphi 0, %s170
    $region4: #{tpu_custom_call.1} parent=1 // loop_header_branch
      %24 = sbr.rel (%p22) target = $region8
    $region5: #{tpu_custom_call.1} parent=1 // loop_body
      %s26 = ssub.s32 %s21, 1
      %s27 = ssub.s32 %s21, 2
      %s34 = sadd.s32 1, %s29
      %p35 = scmp.ge.s32.totalorder %s34, 1
      %s36 = scalar_select %p35, 0, %s34
      %s37 = sadd.s32 1, %s28
      %s38 = scalar_select %p35, %s37, %s28
      %p39 = scmp.ge.s32.totalorder %s38, 2
      %s40 = scalar_select %p39, 0, %s38
      %s41 = ssub.s32 %s28, %s40
      %s42 = ssub.s32 %s29, %s36
      %s43 = sor.u32 %s41, %s42
      %p44 = scmp.eq.s32.totalorder %s43, 0
      %s46 = sadd.s32 %s45, 1
      %s47 = scalar_select %p44, %s45, %s46
      %p50 = pneg %p44
      %p51 = scmp.eq.s32.totalorder %s21, 1
      %p52 = por %p50, %p51
      %p53 = scmp.ne.s32.totalorder %s45, %s48
      %p54 = scmp.eq.s32.totalorder %s21, 0
      %p55 = por %p53, %p54
      %p56 = scmp.ne.s32.totalorder %s45, %s48
      %p57 = scmp.eq.s32.totalorder %s26, 1
      %p58 = por %p56, %p57
      %p59 = scmp.ne.s32.totalorder %s48, %s49
      %p60 = scmp.eq.s32.totalorder %s26, 0
      %p61 = por %p59, %p60
      %p62 = scmp.ne.s32.totalorder %s48, %s49
      %p63 = scmp.eq.s32.totalorder %s27, 1
      %p64 = por %p62, %p63
      %p66 = scmp.ne.s32.totalorder %s49, %s65
      %p67 = scmp.eq.s32.totalorder %s27, 0
      %p68 = por %p66, %p67
      %s69 = sadd.s32 %s29, 1
      %s70 = sadd.s32 %s36, 1
      %s71 = ssub.s32 %s28, %s40
      %s72 = ssub.s32 %s69, %s70
      %s73 = sor.u32 %s71, %s72
      %p74 = scmp.eq.s32.totalorder %s73, 0
      %s76 = sadd.s32 %s75, 1
      %s77 = scalar_select %p74, %s75, %s76
      %p80 = pneg %p74
      %p81 = scmp.eq.s32.totalorder %s21, 1
      %p82 = por %p80, %p81
      %p83 = scmp.ne.s32.totalorder %s75, %s78
      %p84 = scmp.eq.s32.totalorder %s21, 0
      %p85 = por %p83, %p84
      %p86 = scmp.ne.s32.totalorder %s75, %s78
      %p87 = scmp.eq.s32.totalorder %s26, 1
      %p88 = por %p86, %p87
      %p89 = scmp.ne.s32.totalorder %s78, %s79
      %p90 = scmp.eq.s32.totalorder %s26, 0
      %p91 = por %p89, %p90
      %p92 = scmp.ne.s32.totalorder %s78, %s79
      %p93 = scmp.eq.s32.totalorder %s27, 1
      %p94 = por %p92, %p93
      %p96 = scmp.ne.s32.totalorder %s79, %s95
      %p97 = scmp.eq.s32.totalorder %s27, 0
      %p98 = por %p96, %p97
      %s100 = sadd.s32 %s99, 1
      %p103 = scmp.eq.s32.totalorder %s21, 1
      %p104 = scmp.ne.s32.totalorder %s99, %s101
      %p105 = scmp.eq.s32.totalorder %s21, 0
      %p106 = por %p104, %p105
      %p107 = scmp.ne.s32.totalorder %s99, %s101
      %p108 = scmp.eq.s32.totalorder %s26, 1
      %p109 = por %p107, %p108
      %p110 = scmp.ne.s32.totalorder %s101, %s102
      %p111 = scmp.eq.s32.totalorder %s26, 0
      %p112 = por %p110, %p111
      %p113 = scmp.ne.s32.totalorder %s101, %s102
      %p114 = scmp.eq.s32.totalorder %s27, 1
      %p115 = por %p113, %p114
      %p117 = scmp.ne.s32.totalorder %s102, %s116
      %p118 = scmp.eq.s32.totalorder %s27, 0
      %p119 = por %p117, %p118
      %s121 = sadd.s32 %s120, 1
      %p124 = scmp.eq.s32.totalorder %s21, 1
      %p125 = scmp.ne.s32.totalorder %s120, %s122
      %p126 = scmp.eq.s32.totalorder %s21, 0
      %p127 = por %p125, %p126
      %p128 = scmp.ne.s32.totalorder %s120, %s122
      %p129 = scmp.eq.s32.totalorder %s26, 1
      %p130 = por %p128, %p129
      %p131 = scmp.ne.s32.totalorder %s122, %s123
      %p132 = scmp.eq.s32.totalorder %s26, 0
      %p133 = por %p131, %p132
      %p134 = scmp.ne.s32.totalorder %s122, %s123
      %p135 = scmp.eq.s32.totalorder %s27, 1
      %p136 = por %p134, %p135
      %p138 = scmp.ne.s32.totalorder %s123, %s137
      %p139 = scmp.eq.s32.totalorder %s27, 0
      %p140 = por %p138, %p139
      %s142 = sadd.s32 %s141, 1
      %p145 = scmp.eq.s32.totalorder %s21, 1
      %p146 = scmp.ne.s32.totalorder %s141, %s143
      %p147 = scmp.eq.s32.totalorder %s21, 0
      %p148 = por %p146, %p147
      %p149 = scmp.ne.s32.totalorder %s141, %s143
      %p150 = scmp.eq.s32.totalorder %s26, 1
      %p151 = por %p149, %p150
      %p152 = scmp.ne.s32.totalorder %s143, %s144
      %p153 = scmp.eq.s32.totalorder %s26, 0
      %p154 = por %p152, %p153
      %p155 = scmp.ne.s32.totalorder %s143, %s144
      %p156 = scmp.eq.s32.totalorder %s27, 1
      %p157 = por %p155, %p156
      %p159 = scmp.ne.s32.totalorder %s144, %s158
      %p160 = scmp.eq.s32.totalorder %s27, 0
      %p161 = por %p159, %p160
      %s162 = ssub.s32 %s28, %s40
      %s163 = ssub.s32 %s29, %s36
      %s164 = sor.u32 %s162, %s163
      %p165 = scmp.eq.s32.totalorder %s164, 0
      %s167 = sadd.s32 %s166, 1
      %s168 = scalar_select %p165, %s166, %s167
      %p171 = pneg %p165
      %p172 = scmp.eq.s32.totalorder %s21, 1
      %p173 = por %p171, %p172
      %p174 = scmp.ne.s32.totalorder %s166, %s169
      %p175 = scmp.eq.s32.totalorder %s21, 0
      %p176 = por %p174, %p175
      %p177 = scmp.ne.s32.totalorder %s166, %s169
      %p178 = scmp.eq.s32.totalorder %s26, 1
      %p179 = por %p177, %p178
      %p180 = scmp.ne.s32.totalorder %s169, %s170
      %p181 = scmp.eq.s32.totalorder %s26, 0
      %p182 = por %p180, %p181
      %p183 = scmp.ne.s32.totalorder %s169, %s170
      %p184 = scmp.eq.s32.totalorder %s27, 1
      %p185 = por %p183, %p184
      %p187 = scmp.ne.s32.totalorder %s170, %s186
      %p188 = scmp.eq.s32.totalorder %s27, 0
      %p189 = por %p187, %p188
      %p190 = scmp.le.s32.totalorder 1, %s21
      %p191 = scmp.lt.s32.totalorder %s21, 3
      %p192 = pnand %p190, %p191
      %p193 = pneg %p192
      // Predicated region
      $region9: #{tpu_custom_call.1} parent=5 // pred_check
        _
      $region10: #{tpu_custom_call.1} parent=5 // pred_check_branch
        %195 = sbr.rel (%p192) target = $region12
      $region11: #{tpu_custom_call.1} parent=5 // pred_region
        %s196 = ssub.s32 %s21, 1
        // Predicated region
        $region13: #{tpu_custom_call.1} parent=11 // pred_check
          %p197 = pneg %p112
        $region14: #{tpu_custom_call.1} parent=11 // pred_check_branch
          %199 = sbr.rel (%p197) target = $region16
        $region15: #{tpu_custom_call.1} parent=11 // pred_region
          %s201 = ssub.s32 15360, 15360
          %202 = vsyncadd [#allocation7], %s201
          %s203 = sshll.u32 [#allocation8], 4
          %s204 = int_to_ptr.vmem [resolvable:$true] %s203
          %209 = dma.hbm_to_vmem [thread:$0]  %s2, 15360, %s204, [#allocation7], 256, 256, 16
        $region16: #{tpu_custom_call.1} parent=11 // pred_fallthru
          _
        // Predicated region
        $region17: #{tpu_custom_call.1} parent=11 // pred_check
          %p210 = pneg %p133
        $region18: #{tpu_custom_call.1} parent=11 // pred_check_branch
          %212 = sbr.rel (%p210) target = $region20
        $region19: #{tpu_custom_call.1} parent=11 // pred_region
          %s214 = ssub.s32 2048, 2048
          %215 = vsyncadd [#allocation10], %s214
          %s216 = sshll.u32 [#allocation9], 4
          %s217 = int_to_ptr.vmem [resolvable:$true] %s216
          %222 = dma.hbm_to_vmem [thread:$0]  %s3, 2048, %s217, [#allocation10], 64, 64, 4
        $region20: #{tpu_custom_call.1} parent=11 // pred_fallthru
          _
        // Predicated region
        $region21: #{tpu_custom_call.1} parent=11 // pred_check
          %p223 = pneg %p154
        $region22: #{tpu_custom_call.1} parent=11 // pred_check_branch
          %225 = sbr.rel (%p223) target = $region24
        $region23: #{tpu_custom_call.1} parent=11 // pred_region
          %s227 = ssub.s32 2048, 2048
          %228 = vsyncadd [#allocation10], %s227
          %s229 = sshll.u32 [#allocation11], 4
          %s230 = int_to_ptr.vmem [resolvable:$true] %s229
          %235 = dma.hbm_to_vmem [thread:$0]  %s4, 2048, %s230, [#allocation10], 128, 128, 8
        $region24: #{tpu_custom_call.1} parent=11 // pred_fallthru
          _
      $region12: #{tpu_custom_call.1} parent=5 // pred_fallthru
        _
      %p236 = scmp.lt.s32.totalorder %s21, 2
      // Predicated region
      $region25: #{tpu_custom_call.1} parent=5 // pred_check
        %p237 = pneg %p236
      $region26: #{tpu_custom_call.1} parent=5 // pred_check_branch
        %239 = sbr.rel (%p237) target = $region28
      $region27: #{tpu_custom_call.1} parent=5 // pred_region
        // Predicated region
        $region29: #{tpu_custom_call.1} parent=27 // pred_check
          %p240 = pneg %p55
        $region30: #{tpu_custom_call.1} parent=27 // pred_check_branch
          %242 = sbr.rel (%p240) target = $region32
        $region31: #{tpu_custom_call.1} parent=27 // pred_region
          %s243 = sand.u32 %s45, 1
          %s244 = scalar_lea.sflag [#allocation4], %s243
          %s245 = sand.u32 %s45, 1
          %s246 = smul.addr %s245, 32
          %s247 = scalar_lea.vmem [#allocation3], %s246
          %s248 = smul.u32 2, %s29
          %s250 = ssub.s32 512, 512
          %251 = vsyncadd %s244, %s250
          %s252 = smul.addr %s248, 2
          %s253 = smul.addr %s28, 8
          %s254 = sadd.s32 %s252, %s253
          %s255 = smul.addr %s254, 128
          %s256 = scalar_lea.hbm %s0, %s255
          %s257 = sshll.u32 %s247, 4
          %s258 = int_to_ptr.vmem [resolvable:$true] %s257
          %263 = dma.hbm_to_vmem [thread:$0]  %s256, 512, %s258, %s244, 256, 256, 16
        $region32: #{tpu_custom_call.1} parent=27 // pred_fallthru
          _
        // Predicated region
        $region33: #{tpu_custom_call.1} parent=27 // pred_check
          %p264 = pneg %p85
        $region34: #{tpu_custom_call.1} parent=27 // pred_check_branch
          %266 = sbr.rel (%p264) target = $region36
        $region35: #{tpu_custom_call.1} parent=27 // pred_region
          %s267 = sand.u32 %s21, 1
          %s268 = scalar_lea.sflag [#allocation7], %s267
          %s269 = sand.u32 %s75, 1
          %s270 = smul.addr %s269, 32
          %s271 = scalar_lea.vmem [#allocation6], %s270
          %s272 = sadd.s32 %s29, 1
          %s273 = smul.u32 2, %s272
          %s275 = ssub.s32 512, 512
          %276 = vsyncadd %s268, %s275
          %s277 = smul.addr %s273, 2
          %s278 = smul.addr %s28, 8
          %s279 = sadd.s32 %s277, %s278
          %s280 = smul.addr %s279, 128
          %s281 = scalar_lea.hbm %s1, %s280
          %s282 = sshll.u32 %s271, 4
          %s283 = int_to_ptr.vmem [resolvable:$true] %s282
          %288 = dma.hbm_to_vmem [thread:$0]  %s281, 512, %s283, %s268, 256, 256, 16
        $region36: #{tpu_custom_call.1} parent=27 // pred_fallthru
          _
      $region28: #{tpu_custom_call.1} parent=5 // pred_fallthru
        _
      %p289 = scmp.le.s32.totalorder 1, %s21
      %p290 = scmp.lt.s32.totalorder %s21, 3
      %p291 = pnand %p289, %p290
      %p292 = pneg %p291
      // Predicated region
      $region37: #{tpu_custom_call.1} parent=5 // pred_check
        _
      $region38: #{tpu_custom_call.1} parent=5 // pred_check_branch
        %294 = sbr.rel (%p291) target = $region40
      $region39: #{tpu_custom_call.1} parent=5 // pred_region
        %s295 = ssub.s32 %s21, 1
        %s296 = sand.u32 %s48, 1
        %s297 = scalar_lea.sflag [#allocation4], %s296
        %s298 = sand.u32 %s48, 1
        %s299 = smul.addr %s298, 32
        %s300 = scalar_lea.vmem [#allocation3], %s299
        // Predicated region
        $region41: #{tpu_custom_call.1} parent=39 // pred_check
          %p301 = pneg %p61
        $region42: #{tpu_custom_call.1} parent=39 // pred_check_branch
          %303 = sbr.rel (%p301) target = $region44
        $region43: #{tpu_custom_call.1} parent=39 // pred_region
          %304 = dma.done %s297, 512
        $region44: #{tpu_custom_call.1} parent=39 // pred_fallthru
          _
        %s305 = sand.u32 %s26, 1
        %s306 = scalar_lea.sflag [#allocation7], %s305
        %s307 = sand.u32 %s78, 1
        %s308 = smul.addr %s307, 32
        %s309 = scalar_lea.vmem [#allocation6], %s308
        // Predicated region
        $region45: #{tpu_custom_call.1} parent=39 // pred_check
          %p310 = pneg %p91
        $region46: #{tpu_custom_call.1} parent=39 // pred_check_branch
          %312 = sbr.rel (%p310) target = $region48
        $region47: #{tpu_custom_call.1} parent=39 // pred_region
          %313 = dma.done %s306, 512
        $region48: #{tpu_custom_call.1} parent=39 // pred_fallthru
          _
        // Predicated region
        $region49: #{tpu_custom_call.1} parent=39 // pred_check
          %p314 = pneg %p112
        $region50: #{tpu_custom_call.1} parent=39 // pred_check_branch
          %316 = sbr.rel (%p314) target = $region52
        $region51: #{tpu_custom_call.1} parent=39 // pred_region
          %317 = dma.done [#allocation7], 15360
        $region52: #{tpu_custom_call.1} parent=39 // pred_fallthru
          _
        // Predicated region
        $region53: #{tpu_custom_call.1} parent=39 // pred_check
          %p318 = pneg %p133
        $region54: #{tpu_custom_call.1} parent=39 // pred_check_branch
          %320 = sbr.rel (%p318) target = $region56
        $region55: #{tpu_custom_call.1} parent=39 // pred_region
          %321 = dma.done [#allocation10], 2048
        $region56: #{tpu_custom_call.1} parent=39 // pred_fallthru
          _
        // Predicated region
        $region57: #{tpu_custom_call.1} parent=39 // pred_check
          %p322 = pneg %p154
        $region58: #{tpu_custom_call.1} parent=39 // pred_check_branch
          %324 = sbr.rel (%p322) target = $region60
        $region59: #{tpu_custom_call.1} parent=39 // pred_region
          %325 = dma.done [#allocation10], 2048
        $region60: #{tpu_custom_call.1} parent=39 // pred_fallthru
          _
        %s326 = sand.u32 %s48, 1
        %s327 = scalar_lea.sflag [#allocation4], %s326
        %s328 = sand.u32 %s48, 1
        %s329 = smul.addr %s328, 32
        %s330 = scalar_lea.vmem [#allocation3], %s329
        %p331 = pneg %p61
        %p332 = pneg %p58
        %s333 = sand.u32 %s26, 1
        %s334 = scalar_lea.sflag [#allocation7], %s333
        %s335 = sand.u32 %s78, 1
        %s336 = smul.addr %s335, 32
        %s337 = scalar_lea.vmem [#allocation6], %s336
        %p338 = pneg %p91
        %p339 = pneg %p88
        %p340 = pneg %p112
        %p341 = pneg %p109
        %p342 = pneg %p133
        %p343 = pneg %p130
        %p344 = pneg %p154
        %p345 = pneg %p151
        %p346 = pneg %p182
        %p347 = pneg %p179
        %s348 = sand.u32 %s169, 1
        %s349 = scalar_lea.sflag [#allocation5], %s348
        %s350 = sand.u32 %s169, 1
        %s351 = smul.addr %s350, 16
        %s352 = scalar_lea.vmem [#allocation12], %s351
        %s353 = smul.u32 2, %s31
        %s354 = sadd.s32 %s31, 1
        %s355 = smul.u32 2, %s354
        %s356 = smul.u32 2, %s31
        %v358 = vld [vmem:[%s300] sm:$0xff]
        %v359 = vld [vmem:[%s300 + $0x8] sm:$0xff]
        %v360 = vld [vmem:[%s300 + $0x10] sm:$0xff]
        %v361 = vld [vmem:[%s300 + $0x18] sm:$0xff]
        %362 = vst [vmem:[#allocation2] sm:$0xff] %v358
        %vm363 = vcmask 261120
        %364 = vst.msk [vmem:[#allocation2 + $0x8] sm:$0xff] %vm363, %v359
        %365 = vst [vmem:[#allocation2 + $0x10] sm:$0xff] %v360
        %366 = vst.msk [vmem:[#allocation2 + $0x18] sm:$0xff] %vm363, %v361
        %v367 = vld [vmem:[%s309] sm:$0xff]
        %v368 = vld [vmem:[%s309 + $0x8] sm:$0xff]
        %v369 = vld [vmem:[%s309 + $0x10] sm:$0xff]
        %v370 = vld [vmem:[%s309 + $0x18] sm:$0xff]
        %371 = vst [vmem:[#allocation2 + $0x20] sm:$0xff] %v367
        %372 = vst.msk [vmem:[#allocation2 + $0x28] sm:$0xff] %vm363, %v368
        %373 = vst [vmem:[#allocation2 + $0x30] sm:$0xff] %v369
        %374 = vst.msk [vmem:[#allocation2 + $0x38] sm:$0xff] %vm363, %v370
        %v375 = vld [vmem:[#allocation2] sm:$0xff]
        %v376 = vld [vmem:[#allocation2 + $0x8] sm:$0xff]
        %v377 = vld [vmem:[#allocation2 + $0x10] sm:$0xff]
        %v378 = vld [vmem:[#allocation2 + $0x18] sm:$0xff]
        %v379 = vpack.c.bf16 %v377, %v375
        %v380 = vpack.c.bf16 %v378, %v376
        %v381 = vld [vmem:[#allocation8] sm:$0xff]
        %v382 = vld [vmem:[#allocation8 + $0x8] sm:$0xff]
        %v383 = vld [vmem:[#allocation8 + $0x10] sm:$0xff]
        %v384 = vld [vmem:[#allocation8 + $0x18] sm:$0xff]
        %v385 = vld [vmem:[#allocation8 + $0x20] sm:$0xff]
        %v386 = vld [vmem:[#allocation8 + $0x28] sm:$0xff]
        %v387 = vld [vmem:[#allocation8 + $0x30] sm:$0xff]
        %v388 = vld [vmem:[#allocation8 + $0x38] sm:$0xff]
        %v389 = vld [vmem:[#allocation8 + $0x40] sm:$0xff]
        %v390 = vld [vmem:[#allocation8 + $0x48] sm:$0xff]
        %v391 = vld [vmem:[#allocation8 + $0x50] sm:$0xff]
        %v392 = vld [vmem:[#allocation8 + $0x58] sm:$0xff]
        %v393 = vld [vmem:[#allocation8 + $0x60] sm:$0xff]
        %v394 = vld [vmem:[#allocation8 + $0x68] sm:$0xff]
        %v395 = vld [vmem:[#allocation8 + $0x70] sm:$0xff]
        %v396 = vld [vmem:[#allocation8 + $0x78] sm:$0xff]
        %v397 = vld [vmem:[#allocation8 + $0x80] sm:$0xff]
        %v398 = vld [vmem:[#allocation8 + $0x88] sm:$0xff]
        %v399 = vld [vmem:[#allocation8 + $0x90] sm:$0xff]
        %v400 = vld [vmem:[#allocation8 + $0x98] sm:$0xff]
        %v401 = vld [vmem:[#allocation8 + $0xa0] sm:$0xff]
        %v402 = vld [vmem:[#allocation8 + $0xa8] sm:$0xff]
        %v403 = vld [vmem:[#allocation8 + $0xb0] sm:$0xff]
        %v404 = vld [vmem:[#allocation8 + $0xb8] sm:$0xff]
        %v405 = vld [vmem:[#allocation8 + $0xc0] sm:$0xff]
        %v406 = vld [vmem:[#allocation8 + $0xc8] sm:$0xff]
        %v407 = vld [vmem:[#allocation8 + $0xd0] sm:$0xff]
        %v408 = vld [vmem:[#allocation8 + $0xd8] sm:$0xff]
        %v409 = vld [vmem:[#allocation8 + $0xe0] sm:$0xff]
        %v410 = vld [vmem:[#allocation8 + $0xe8] sm:$0xff]
        %v411 = vld [vmem:[#allocation8 + $0xf0] sm:$0xff]
        %v412 = vld [vmem:[#allocation8 + $0xf8] sm:$0xff]
        %v413 = vld [vmem:[#allocation8 + $0x100] sm:$0xff]
        %v414 = vld [vmem:[#allocation8 + $0x108] sm:$0xff]
        %v415 = vld [vmem:[#allocation8 + $0x110] sm:$0xff]
        %v416 = vld [vmem:[#allocation8 + $0x118] sm:$0xff]
        %v417 = vld [vmem:[#allocation8 + $0x120] sm:$0xff]
        %v418 = vld [vmem:[#allocation8 + $0x128] sm:$0xff]
        %v419 = vld [vmem:[#allocation8 + $0x130] sm:$0xff]
        %v420 = vld [vmem:[#allocation8 + $0x138] sm:$0xff]
        %v421 = vld [vmem:[#allocation2] sm:$0xfe]
        %v422 = vld [vmem:[#allocation2 + $0x8] sm:$0xfe]
        %v423 = vld [vmem:[#allocation2 + $0x20] sm:$0x1]
        %v424 = vld [vmem:[#allocation2 + $0x28] sm:$0x1]
        %v425 = vpack.c.bf16 %v377, %v421
        %v426 = vpack.c.bf16 %v378, %v422
        %v427 = vpack.c.bf16 %v423, %v423
        %v428 = vpack.c.bf16 %v424, %v424
        %v429 = vld [vmem:[#allocation8 + $0x140] sm:$0xff]
        %v430 = vld [vmem:[#allocation8 + $0x148] sm:$0xff]
        %v431 = vld [vmem:[#allocation8 + $0x150] sm:$0xff]
        %v432 = vld [vmem:[#allocation8 + $0x158] sm:$0xff]
        %v433 = vld [vmem:[#allocation8 + $0x160] sm:$0xff]
        %v434 = vld [vmem:[#allocation8 + $0x168] sm:$0xff]
        %v435 = vld [vmem:[#allocation8 + $0x170] sm:$0xff]
        %v436 = vld [vmem:[#allocation8 + $0x178] sm:$0xff]
        %v437 = vld [vmem:[#allocation8 + $0x180] sm:$0xff]
        %v438 = vld [vmem:[#allocation8 + $0x188] sm:$0xff]
        %v439 = vld [vmem:[#allocation8 + $0x190] sm:$0xff]
        %v440 = vld [vmem:[#allocation8 + $0x198] sm:$0xff]
        %v441 = vld [vmem:[#allocation8 + $0x1a0] sm:$0xff]
        %v442 = vld [vmem:[#allocation8 + $0x1a8] sm:$0xff]
        %v443 = vld [vmem:[#allocation8 + $0x1b0] sm:$0xff]
        %v444 = vld [vmem:[#allocation8 + $0x1b8] sm:$0xff]
        %v445 = vld [vmem:[#allocation8 + $0x1c0] sm:$0xff]
        %v446 = vld [vmem:[#allocation8 + $0x1c8] sm:$0xff]
        %v447 = vld [vmem:[#allocation8 + $0x1d0] sm:$0xff]
        %v448 = vld [vmem:[#allocation8 + $0x1d8] sm:$0xff]
        %v449 = vld [vmem:[#allocation8 + $0x1e0] sm:$0xff]
        %v450 = vld [vmem:[#allocation8 + $0x1e8] sm:$0xff]
        %v451 = vld [vmem:[#allocation8 + $0x1f0] sm:$0xff]
        %v452 = vld [vmem:[#allocation8 + $0x1f8] sm:$0xff]
        %v453 = vld [vmem:[#allocation8 + $0x200] sm:$0xff]
        %v454 = vld [vmem:[#allocation8 + $0x208] sm:$0xff]
        %v455 = vld [vmem:[#allocation8 + $0x210] sm:$0xff]
        %v456 = vld [vmem:[#allocation8 + $0x218] sm:$0xff]
        %v457 = vld [vmem:[#allocation8 + $0x220] sm:$0xff]
        %v458 = vld [vmem:[#allocation8 + $0x228] sm:$0xff]
        %v459 = vld [vmem:[#allocation8 + $0x230] sm:$0xff]
        %v460 = vld [vmem:[#allocation8 + $0x238] sm:$0xff]
        %v461 = vld [vmem:[#allocation8 + $0x240] sm:$0xff]
        %v462 = vld [vmem:[#allocation8 + $0x248] sm:$0xff]
        %v463 = vld [vmem:[#allocation8 + $0x250] sm:$0xff]
        %v464 = vld [vmem:[#allocation8 + $0x258] sm:$0xff]
        %v465 = vld [vmem:[#allocation8 + $0x260] sm:$0xff]
        %v466 = vld [vmem:[#allocation8 + $0x268] sm:$0xff]
        %v467 = vld [vmem:[#allocation8 + $0x270] sm:$0xff]
        %v468 = vld [vmem:[#allocation8 + $0x278] sm:$0xff]
        %vm469 = vsmask.f32 7424
        %v471 = vshrl.u32 %v425, 16
        %v473 = vshll.u32 %v425, 16
        %v475 = vrot.slane %v473, 1
        %v476 = vor.u32 %v471, %v475
        %v478 = vshll.u32 %v427, 16
        %v480 = vrot.slane %v478, 1
        %v481 = vsel %vm469, %v476, %v480
        %v483 = vshrl.u32 %v426, 16
        %v485 = vshll.u32 %v426, 16
        %v487 = vrot.slane %v485, 1
        %v488 = vor.u32 %v483, %v487
        %v490 = vshll.u32 %v428, 16
        %v492 = vrot.slane %v490, 1
        %v493 = vsel %vm469, %v488, %v492
        %v535 = vunpack.c.l.b16 %v429
        %v536 = vunpack.c.h.b16 %v429
        %v537 = vunpack.c.l.b16 %v430
        %v538 = vunpack.c.h.b16 %v430
        %v539 = vunpack.c.l.b16 %v431
        %v540 = vunpack.c.h.b16 %v431
        %v541 = vunpack.c.l.b16 %v432
        %v542 = vunpack.c.h.b16 %v432
        %v543 = vunpack.c.l.b16 %v433
        %v544 = vunpack.c.h.b16 %v433
        %v545 = vunpack.c.l.b16 %v434
        %v546 = vunpack.c.h.b16 %v434
        %v547 = vunpack.c.l.b16 %v435
        %v548 = vunpack.c.h.b16 %v435
        %v549 = vunpack.c.l.b16 %v436
        %v550 = vunpack.c.h.b16 %v436
        %v551 = vunpack.c.l.b16 %v437
        %v552 = vunpack.c.h.b16 %v437
        %v553 = vunpack.c.l.b16 %v438
        %v554 = vunpack.c.h.b16 %v438
        %v555 = vunpack.c.l.b16 %v439
        %v556 = vunpack.c.h.b16 %v439
        %v557 = vunpack.c.l.b16 %v440
        %v558 = vunpack.c.h.b16 %v440
        %v559 = vunpack.c.l.b16 %v441
        %v560 = vunpack.c.h.b16 %v441
        %v561 = vunpack.c.l.b16 %v442
        %v562 = vunpack.c.h.b16 %v442
        %v563 = vunpack.c.l.b16 %v443
        %v564 = vunpack.c.h.b16 %v443
        %v565 = vunpack.c.l.b16 %v444
        %v566 = vunpack.c.h.b16 %v444
        %v567 = vunpack.c.l.b16 %v445
        %v568 = vunpack.c.h.b16 %v445
        %v569 = vunpack.c.l.b16 %v446
        %v570 = vunpack.c.h.b16 %v446
        %v571 = vunpack.c.l.b16 %v447
        %v572 = vunpack.c.h.b16 %v447
        %v573 = vunpack.c.l.b16 %v448
        %v574 = vunpack.c.h.b16 %v448
        %v575 = vunpack.c.l.b16 %v449
        %v576 = vunpack.c.h.b16 %v449
        %v577 = vunpack.c.l.b16 %v450
        %v578 = vunpack.c.h.b16 %v450
        %v579 = vunpack.c.l.b16 %v451
        %v580 = vunpack.c.h.b16 %v451
        %v581 = vunpack.c.l.b16 %v452
        %v582 = vunpack.c.h.b16 %v452
        %v583 = vunpack.c.l.b16 %v453
        %v584 = vunpack.c.h.b16 %v453
        %v585 = vunpack.c.l.b16 %v454
        %v586 = vunpack.c.h.b16 %v454
        %v587 = vunpack.c.l.b16 %v455
        %v588 = vunpack.c.h.b16 %v455
        %v589 = vunpack.c.l.b16 %v456
        %v590 = vunpack.c.h.b16 %v456
        %v591 = vunpack.c.l.b16 %v457
        %v592 = vunpack.c.h.b16 %v457
        %v593 = vunpack.c.l.b16 %v458
        %v594 = vunpack.c.h.b16 %v458
        %v595 = vunpack.c.l.b16 %v459
        %v596 = vunpack.c.h.b16 %v459
        %v597 = vunpack.c.l.b16 %v460
        %v598 = vunpack.c.h.b16 %v460
        %v599 = vunpack.c.l.b16 %v461
        %v600 = vunpack.c.h.b16 %v461
        %v601 = vunpack.c.l.b16 %v462
        %v602 = vunpack.c.h.b16 %v462
        %v603 = vunpack.c.l.b16 %v463
        %v604 = vunpack.c.h.b16 %v463
        %v605 = vunpack.c.l.b16 %v464
        %v606 = vunpack.c.h.b16 %v464
        %v607 = vunpack.c.l.b16 %v465
        %v608 = vunpack.c.h.b16 %v465
        %v609 = vunpack.c.l.b16 %v466
        %v610 = vunpack.c.h.b16 %v466
        %v611 = vunpack.c.l.b16 %v467
        %v612 = vunpack.c.h.b16 %v467
        %v613 = vunpack.c.l.b16 %v468
        %v614 = vunpack.c.h.b16 %v468
        %v615 = vpack.c.b16 %v539, %v535
        %v616 = vpack.c.b16 %v540, %v536
        %v617 = vpack.c.b16 %v541, %v537
        %v618 = vpack.c.b16 %v542, %v538
        %v619 = vpack.c.b16 %v547, %v543
        %v620 = vpack.c.b16 %v548, %v544
        %v621 = vpack.c.b16 %v549, %v545
        %v622 = vpack.c.b16 %v550, %v546
        %v623 = vpack.c.b16 %v555, %v551
        %v624 = vpack.c.b16 %v556, %v552
        %v625 = vpack.c.b16 %v557, %v553
        %v626 = vpack.c.b16 %v558, %v554
        %v627 = vpack.c.b16 %v563, %v559
        %v628 = vpack.c.b16 %v564, %v560
        %v629 = vpack.c.b16 %v565, %v561
        %v630 = vpack.c.b16 %v566, %v562
        %v631 = vpack.c.b16 %v571, %v567
        %v632 = vpack.c.b16 %v572, %v568
        %v633 = vpack.c.b16 %v573, %v569
        %v634 = vpack.c.b16 %v574, %v570
        %v635 = vpack.c.b16 %v579, %v575
        %v636 = vpack.c.b16 %v580, %v576
        %v637 = vpack.c.b16 %v581, %v577
        %v638 = vpack.c.b16 %v582, %v578
        %v639 = vpack.c.b16 %v587, %v583
        %v640 = vpack.c.b16 %v588, %v584
        %v641 = vpack.c.b16 %v589, %v585
        %v642 = vpack.c.b16 %v590, %v586
        %v643 = vpack.c.b16 %v595, %v591
        %v644 = vpack.c.b16 %v596, %v592
        %v645 = vpack.c.b16 %v597, %v593
        %v646 = vpack.c.b16 %v598, %v594
        %v647 = vpack.c.b16 %v603, %v599
        %v648 = vpack.c.b16 %v604, %v600
        %v649 = vpack.c.b16 %v605, %v601
        %v650 = vpack.c.b16 %v606, %v602
        %v651 = vpack.c.b16 %v611, %v607
        %v652 = vpack.c.b16 %v612, %v608
        %v653 = vpack.c.b16 %v613, %v609
        %v654 = vpack.c.b16 %v614, %v610
        %v696 = vsel %vm363, %v493, 0
        %698 = vmatprep.subr.bf16.mxu0 %v616
        %699 = vmatpush1.bf16.msra.mxu0 %v615
        %700 = vmatprep.subr.bf16.mxu0 %v620
        %701 = vmatpush1.bf16.msra.mxu0 %v619
        %702 = vmatprep.subr.bf16.mxu0 %v624
        %703 = vmatpush1.bf16.msra.mxu0 %v623
        %704 = vmatprep.subr.bf16.mxu0 %v628
        %705 = vmatpush1.bf16.msra.mxu0 %v627
        %706 = vmatprep.subr.bf16.mxu0 %v632
        %707 = vmatpush1.bf16.msra.mxu0 %v631
        %708 = vmatprep.subr.bf16.mxu0 %v636
        %709 = vmatpush1.bf16.msra.mxu0 %v635
        %710 = vmatprep.subr.bf16.mxu0 %v640
        %711 = vmatpush1.bf16.msra.mxu0 %v639
        %712 = vmatprep.subr.bf16.mxu0 %v644
        %713 = vmatpush1.bf16.msra.mxu0 %v643
        %714 = vmatprep.subr.bf16.mxu0 %v648
        %715 = vmatpush1.bf16.msra.mxu0 %v647
        %716 = vmatprep.subr.bf16.mxu0 %v652
        %717 = vmatpush1.bf16.msra.mxu0 %v651
        %718 = vmatprep.subr.bf16.mxu0 0
        %719 = vmatpush1.bf16.msra.mxu0 0
        %720 = vmatprep.subr.bf16.mxu0 0
        %721 = vmatpush1.bf16.msra.mxu0 0
        %722 = vmatprep.subr.bf16.mxu0 0
        %723 = vmatpush1.bf16.msra.mxu0 0
        %724 = vmatprep.subr.bf16.mxu0 0
        %725 = vmatpush1.bf16.msra.mxu0 0
        %726 = vmatprep.subr.bf16.mxu0 0
        %727 = vmatpush1.bf16.msra.mxu0 0
        %728 = vmatprep.subr.bf16.mxu0 0
        %729 = vmatpush1.bf16.msra.mxu0 0
        %730 = vmatprep.mubr.bf16.mxu0 %v696
        %731 = vmatmul.mubr.bf16.gmra.mrb[0].mxu0 %v481
        %v732 = vpop.f32.mrb[0].mxu0
        %v733 = vadd.f32 0.0, %v732
        %v734 = vpop.f32.mrb[0].mxu0
        %v735 = vadd.f32 0.0, %v734
        %v736 = vpop.f32.mrb[0].mxu0
        %v737 = vadd.f32 0.0, %v736
        %v738 = vpop.f32.mrb[0].mxu0
        %v739 = vadd.f32 0.0, %v738
        %740 = vdwg.mxu0
        %741 = vmatprep.subr.bf16.mxu0 %v618
        %742 = vmatpush1.bf16.msra.mxu0 %v617
        %743 = vmatprep.subr.bf16.mxu0 %v622
        %744 = vmatpush1.bf16.msra.mxu0 %v621
        %745 = vmatprep.subr.bf16.mxu0 %v626
        %746 = vmatpush1.bf16.msra.mxu0 %v625
        %747 = vmatprep.subr.bf16.mxu0 %v630
        %748 = vmatpush1.bf16.msra.mxu0 %v629
        %749 = vmatprep.subr.bf16.mxu0 %v634
        %750 = vmatpush1.bf16.msra.mxu0 %v633
        %751 = vmatprep.subr.bf16.mxu0 %v638
        %752 = vmatpush1.bf16.msra.mxu0 %v637
        %753 = vmatprep.subr.bf16.mxu0 %v642
        %754 = vmatpush1.bf16.msra.mxu0 %v641
        %755 = vmatprep.subr.bf16.mxu0 %v646
        %756 = vmatpush1.bf16.msra.mxu0 %v645
        %757 = vmatprep.subr.bf16.mxu0 %v650
        %758 = vmatpush1.bf16.msra.mxu0 %v649
        %759 = vmatprep.subr.bf16.mxu0 %v654
        %760 = vmatpush1.bf16.msra.mxu0 %v653
        %761 = vmatprep.subr.bf16.mxu0 0
        %762 = vmatpush1.bf16.msra.mxu0 0
        %763 = vmatprep.subr.bf16.mxu0 0
        %764 = vmatpush1.bf16.msra.mxu0 0
        %765 = vmatprep.subr.bf16.mxu0 0
        %766 = vmatpush1.bf16.msra.mxu0 0
        %767 = vmatprep.subr.bf16.mxu0 0
        %768 = vmatpush1.bf16.msra.mxu0 0
        %769 = vmatprep.subr.bf16.mxu0 0
        %770 = vmatpush1.bf16.msra.mxu0 0
        %771 = vmatprep.subr.bf16.mxu0 0
        %772 = vmatpush1.bf16.msra.mxu0 0
        %773 = vmatprep.mubr.bf16.mxu0 %v696
        %774 = vmatmul.mubr.bf16.gmra.mrb[0].mxu0 %v481
        %v775 = vpop.f32.mrb[0].mxu0
        %v776 = vadd.f32 0.0, %v775
        %v777 = vpop.f32.mrb[0].mxu0
        %v778 = vadd.f32 0.0, %v777
        %v779 = vpop.f32.mrb[0].mxu0
        %v780 = vadd.f32 0.0, %v779
        %v781 = vpop.f32.mrb[0].mxu0
        %v782 = vadd.f32 0.0, %v781
        %783 = vdwg.mxu0
        %v824 = vunpack.c.l.b16 %v381
        %v825 = vunpack.c.h.b16 %v381
        %v826 = vunpack.c.l.b16 %v382
        %v827 = vunpack.c.h.b16 %v382
        %v828 = vunpack.c.l.b16 %v383
        %v829 = vunpack.c.h.b16 %v383
        %v830 = vunpack.c.l.b16 %v384
        %v831 = vunpack.c.h.b16 %v384
        %v832 = vunpack.c.l.b16 %v385
        %v833 = vunpack.c.h.b16 %v385
        %v834 = vunpack.c.l.b16 %v386
        %v835 = vunpack.c.h.b16 %v386
        %v836 = vunpack.c.l.b16 %v387
        %v837 = vunpack.c.h.b16 %v387
        %v838 = vunpack.c.l.b16 %v388
        %v839 = vunpack.c.h.b16 %v388
        %v840 = vunpack.c.l.b16 %v389
        %v841 = vunpack.c.h.b16 %v389
        %v842 = vunpack.c.l.b16 %v390
        %v843 = vunpack.c.h.b16 %v390
        %v844 = vunpack.c.l.b16 %v391
        %v845 = vunpack.c.h.b16 %v391
        %v846 = vunpack.c.l.b16 %v392
        %v847 = vunpack.c.h.b16 %v392
        %v848 = vunpack.c.l.b16 %v393
        %v849 = vunpack.c.h.b16 %v393
        %v850 = vunpack.c.l.b16 %v394
        %v851 = vunpack.c.h.b16 %v394
        %v852 = vunpack.c.l.b16 %v395
        %v853 = vunpack.c.h.b16 %v395
        %v854 = vunpack.c.l.b16 %v396
        %v855 = vunpack.c.h.b16 %v396
        %v856 = vunpack.c.l.b16 %v397
        %v857 = vunpack.c.h.b16 %v397
        %v858 = vunpack.c.l.b16 %v398
        %v859 = vunpack.c.h.b16 %v398
        %v860 = vunpack.c.l.b16 %v399
        %v861 = vunpack.c.h.b16 %v399
        %v862 = vunpack.c.l.b16 %v400
        %v863 = vunpack.c.h.b16 %v400
        %v864 = vunpack.c.l.b16 %v401
        %v865 = vunpack.c.h.b16 %v401
        %v866 = vunpack.c.l.b16 %v402
        %v867 = vunpack.c.h.b16 %v402
        %v868 = vunpack.c.l.b16 %v403
        %v869 = vunpack.c.h.b16 %v403
        %v870 = vunpack.c.l.b16 %v404
        %v871 = vunpack.c.h.b16 %v404
        %v872 = vunpack.c.l.b16 %v405
        %v873 = vunpack.c.h.b16 %v405
        %v874 = vunpack.c.l.b16 %v406
        %v875 = vunpack.c.h.b16 %v406
        %v876 = vunpack.c.l.b16 %v407
        %v877 = vunpack.c.h.b16 %v407
        %v878 = vunpack.c.l.b16 %v408
        %v879 = vunpack.c.h.b16 %v408
        %v880 = vunpack.c.l.b16 %v409
        %v881 = vunpack.c.h.b16 %v409
        %v882 = vunpack.c.l.b16 %v410
        %v883 = vunpack.c.h.b16 %v410
        %v884 = vunpack.c.l.b16 %v411
        %v885 = vunpack.c.h.b16 %v411
        %v886 = vunpack.c.l.b16 %v412
        %v887 = vunpack.c.h.b16 %v412
        %v888 = vunpack.c.l.b16 %v413
        %v889 = vunpack.c.h.b16 %v413
        %v890 = vunpack.c.l.b16 %v414
        %v891 = vunpack.c.h.b16 %v414
        %v892 = vunpack.c.l.b16 %v415
        %v893 = vunpack.c.h.b16 %v415
        %v894 = vunpack.c.l.b16 %v416
        %v895 = vunpack.c.h.b16 %v416
        %v896 = vunpack.c.l.b16 %v417
        %v897 = vunpack.c.h.b16 %v417
        %v898 = vunpack.c.l.b16 %v418
        %v899 = vunpack.c.h.b16 %v418
        %v900 = vunpack.c.l.b16 %v419
        %v901 = vunpack.c.h.b16 %v419
        %v902 = vunpack.c.l.b16 %v420
        %v903 = vunpack.c.h.b16 %v420
        %v904 = vpack.c.b16 %v828, %v824
        %v905 = vpack.c.b16 %v829, %v825
        %v906 = vpack.c.b16 %v830, %v826
        %v907 = vpack.c.b16 %v831, %v827
        %v908 = vpack.c.b16 %v836, %v832
        %v909 = vpack.c.b16 %v837, %v833
        %v910 = vpack.c.b16 %v838, %v834
        %v911 = vpack.c.b16 %v839, %v835
        %v912 = vpack.c.b16 %v844, %v840
        %v913 = vpack.c.b16 %v845, %v841
        %v914 = vpack.c.b16 %v846, %v842
        %v915 = vpack.c.b16 %v847, %v843
        %v916 = vpack.c.b16 %v852, %v848
        %v917 = vpack.c.b16 %v853, %v849
        %v918 = vpack.c.b16 %v854, %v850
        %v919 = vpack.c.b16 %v855, %v851
        %v920 = vpack.c.b16 %v860, %v856
        %v921 = vpack.c.b16 %v861, %v857
        %v922 = vpack.c.b16 %v862, %v858
        %v923 = vpack.c.b16 %v863, %v859
        %v924 = vpack.c.b16 %v868, %v864
        %v925 = vpack.c.b16 %v869, %v865
        %v926 = vpack.c.b16 %v870, %v866
        %v927 = vpack.c.b16 %v871, %v867
        %v928 = vpack.c.b16 %v876, %v872
        %v929 = vpack.c.b16 %v877, %v873
        %v930 = vpack.c.b16 %v878, %v874
        %v931 = vpack.c.b16 %v879, %v875
        %v932 = vpack.c.b16 %v884, %v880
        %v933 = vpack.c.b16 %v885, %v881
        %v934 = vpack.c.b16 %v886, %v882
        %v935 = vpack.c.b16 %v887, %v883
        %v936 = vpack.c.b16 %v892, %v888
        %v937 = vpack.c.b16 %v893, %v889
        %v938 = vpack.c.b16 %v894, %v890
        %v939 = vpack.c.b16 %v895, %v891
        %v940 = vpack.c.b16 %v900, %v896
        %v941 = vpack.c.b16 %v901, %v897
        %v942 = vpack.c.b16 %v902, %v898
        %v943 = vpack.c.b16 %v903, %v899
        %v985 = vsel %vm363, %v380, 0
        %987 = vmatprep.subr.bf16.mxu0 %v905
        %988 = vmatpush1.bf16.msra.mxu0 %v904
        %989 = vmatprep.subr.bf16.mxu0 %v909
        %990 = vmatpush1.bf16.msra.mxu0 %v908
        %991 = vmatprep.subr.bf16.mxu0 %v913
        %992 = vmatpush1.bf16.msra.mxu0 %v912
        %993 = vmatprep.subr.bf16.mxu0 %v917
        %994 = vmatpush1.bf16.msra.mxu0 %v916
        %995 = vmatprep.subr.bf16.mxu0 %v921
        %996 = vmatpush1.bf16.msra.mxu0 %v920
        %997 = vmatprep.subr.bf16.mxu0 %v925
        %998 = vmatpush1.bf16.msra.mxu0 %v924
        %999 = vmatprep.subr.bf16.mxu0 %v929
        %1000 = vmatpush1.bf16.msra.mxu0 %v928
        %1001 = vmatprep.subr.bf16.mxu0 %v933
        %1002 = vmatpush1.bf16.msra.mxu0 %v932
        %1003 = vmatprep.subr.bf16.mxu0 %v937
        %1004 = vmatpush1.bf16.msra.mxu0 %v936
        %1005 = vmatprep.subr.bf16.mxu0 %v941
        %1006 = vmatpush1.bf16.msra.mxu0 %v940
        %1007 = vmatprep.subr.bf16.mxu0 0
        %1008 = vmatpush1.bf16.msra.mxu0 0
        %1009 = vmatprep.subr.bf16.mxu0 0
        %1010 = vmatpush1.bf16.msra.mxu0 0
        %1011 = vmatprep.subr.bf16.mxu0 0
        %1012 = vmatpush1.bf16.msra.mxu0 0
        %1013 = vmatprep.subr.bf16.mxu0 0
        %1014 = vmatpush1.bf16.msra.mxu0 0
        %1015 = vmatprep.subr.bf16.mxu0 0
        %1016 = vmatpush1.bf16.msra.mxu0 0
        %1017 = vmatprep.subr.bf16.mxu0 0
        %1018 = vmatpush1.bf16.msra.mxu0 0
        %1019 = vmatprep.mubr.bf16.mxu0 %v985
        %1020 = vmatmul.mubr.bf16.gmra.mrb[0].mxu0 %v379
        %v1021 = vpop.f32.mrb[0].mxu0
        %v1022 = vadd.f32 %v733, %v1021
        %v1023 = vpop.f32.mrb[0].mxu0
        %v1024 = vadd.f32 %v735, %v1023
        %v1025 = vpop.f32.mrb[0].mxu0
        %v1026 = vadd.f32 %v737, %v1025
        %v1027 = vpop.f32.mrb[0].mxu0
        %v1028 = vadd.f32 %v739, %v1027
        %1029 = vdwg.mxu0
        %1030 = vmatprep.subr.bf16.mxu0 %v907
        %1031 = vmatpush1.bf16.msra.mxu0 %v906
        %1032 = vmatprep.subr.bf16.mxu0 %v911
        %1033 = vmatpush1.bf16.msra.mxu0 %v910
        %1034 = vmatprep.subr.bf16.mxu0 %v915
        %1035 = vmatpush1.bf16.msra.mxu0 %v914
        %1036 = vmatprep.subr.bf16.mxu0 %v919
        %1037 = vmatpush1.bf16.msra.mxu0 %v918
        %1038 = vmatprep.subr.bf16.mxu0 %v923
        %1039 = vmatpush1.bf16.msra.mxu0 %v922
        %1040 = vmatprep.subr.bf16.mxu0 %v927
        %1041 = vmatpush1.bf16.msra.mxu0 %v926
        %1042 = vmatprep.subr.bf16.mxu0 %v931
        %1043 = vmatpush1.bf16.msra.mxu0 %v930
        %1044 = vmatprep.subr.bf16.mxu0 %v935
        %1045 = vmatpush1.bf16.msra.mxu0 %v934
        %1046 = vmatprep.subr.bf16.mxu0 %v939
        %1047 = vmatpush1.bf16.msra.mxu0 %v938
        %1048 = vmatprep.subr.bf16.mxu0 %v943
        %1049 = vmatpush1.bf16.msra.mxu0 %v942
        %1050 = vmatprep.subr.bf16.mxu0 0
        %1051 = vmatpush1.bf16.msra.mxu0 0
        %1052 = vmatprep.subr.bf16.mxu0 0
        %1053 = vmatpush1.bf16.msra.mxu0 0
        %1054 = vmatprep.subr.bf16.mxu0 0
        %1055 = vmatpush1.bf16.msra.mxu0 0
        %1056 = vmatprep.subr.bf16.mxu0 0
        %1057 = vmatpush1.bf16.msra.mxu0 0
        %1058 = vmatprep.subr.bf16.mxu0 0
        %1059 = vmatpush1.bf16.msra.mxu0 0
        %1060 = vmatprep.subr.bf16.mxu0 0
        %1061 = vmatpush1.bf16.msra.mxu0 0
        %1062 = vmatprep.mubr.bf16.mxu0 %v985
        %1063 = vmatmul.mubr.bf16.gmra.mrb[0].mxu0 %v379
        %v1064 = vpop.f32.mrb[0].mxu0
        %v1065 = vadd.f32 %v776, %v1064
        %v1066 = vpop.f32.mrb[0].mxu0
        %v1067 = vadd.f32 %v778, %v1066
        %v1068 = vpop.f32.mrb[0].mxu0
        %v1069 = vadd.f32 %v780, %v1068
        %v1070 = vpop.f32.mrb[0].mxu0
        %v1071 = vadd.f32 %v782, %v1070
        %1072 = vdwg.mxu0
        %v1073 = vld [vmem:[#allocation2] sm:$0xfc]
        %v1074 = vld [vmem:[#allocation2 + $0x8] sm:$0xfc]
        %v1075 = vld [vmem:[#allocation2 + $0x20] sm:$0x3]
        %v1076 = vld [vmem:[#allocation2 + $0x28] sm:$0x3]
        %v1077 = vpack.c.bf16 %v377, %v1073
        %v1078 = vpack.c.bf16 %v378, %v1074
        %v1079 = vpack.c.bf16 %v1075, %v1075
        %v1080 = vpack.c.bf16 %v1076, %v1076
        %v1081 = vld [vmem:[#allocation8 + $0x280] sm:$0xff]
        %v1082 = vld [vmem:[#allocation8 + $0x288] sm:$0xff]
        %v1083 = vld [vmem:[#allocation8 + $0x290] sm:$0xff]
        %v1084 = vld [vmem:[#allocation8 + $0x298] sm:$0xff]
        %v1085 = vld [vmem:[#allocation8 + $0x2a0] sm:$0xff]
        %v1086 = vld [vmem:[#allocation8 + $0x2a8] sm:$0xff]
        %v1087 = vld [vmem:[#allocation8 + $0x2b0] sm:$0xff]
        %v1088 = vld [vmem:[#allocation8 + $0x2b8] sm:$0xff]
        %v1089 = vld [vmem:[#allocation8 + $0x2c0] sm:$0xff]
        %v1090 = vld [vmem:[#allocation8 + $0x2c8] sm:$0xff]
        %v1091 = vld [vmem:[#allocation8 + $0x2d0] sm:$0xff]
        %v1092 = vld [vmem:[#allocation8 + $0x2d8] sm:$0xff]
        %v1093 = vld [vmem:[#allocation8 + $0x2e0] sm:$0xff]
        %v1094 = vld [vmem:[#allocation8 + $0x2e8] sm:$0xff]
        %v1095 = vld [vmem:[#allocation8 + $0x2f0] sm:$0xff]
        %v1096 = vld [vmem:[#allocation8 + $0x2f8] sm:$0xff]
        %v1097 = vld [vmem:[#allocation8 + $0x300] sm:$0xff]
        %v1098 = vld [vmem:[#allocation8 + $0x308] sm:$0xff]
        %v1099 = vld [vmem:[#allocation8 + $0x310] sm:$0xff]
        %v1100 = vld [vmem:[#allocation8 + $0x318] sm:$0xff]
        %v1101 = vld [vmem:[#allocation8 + $0x320] sm:$0xff]
        %v1102 = vld [vmem:[#allocation8 + $0x328] sm:$0xff]
        %v1103 = vld [vmem:[#allocation8 + $0x330] sm:$0xff]
        %v1104 = vld [vmem:[#allocation8 + $0x338] sm:$0xff]
        %v1105 = vld [vmem:[#allocation8 + $0x340] sm:$0xff]
        %v1106 = vld [vmem:[#allocation8 + $0x348] sm:$0xff]
        %v1107 = vld [vmem:[#allocation8 + $0x350] sm:$0xff]
        %v1108 = vld [vmem:[#allocation8 + $0x358] sm:$0xff]
        %v1109 = vld [vmem:[#allocation8 + $0x360] sm:$0xff]
        %v1110 = vld [vmem:[#allocation8 + $0x368] sm:$0xff]
        %v1111 = vld [vmem:[#allocation8 + $0x370] sm:$0xff]
        %v1112 = vld [vmem:[#allocation8 + $0x378] sm:$0xff]
        %v1113 = vld [vmem:[#allocation8 + $0x380] sm:$0xff]
        %v1114 = vld [vmem:[#allocation8 + $0x388] sm:$0xff]
        %v1115 = vld [vmem:[#allocation8 + $0x390] sm:$0xff]
        %v1116 = vld [vmem:[#allocation8 + $0x398] sm:$0xff]
        %v1117 = vld [vmem:[#allocation8 + $0x3a0] sm:$0xff]
        %v1118 = vld [vmem:[#allocation8 + $0x3a8] sm:$0xff]
        %v1119 = vld [vmem:[#allocation8 + $0x3b0] sm:$0xff]
        %v1120 = vld [vmem:[#allocation8 + $0x3b8] sm:$0xff]
        %vm1125 = vcmask 1046528
        %v1126 = vrot.slane %v1077, 1
        %v1127 = vrot.slane %v1079, 1
        %v1128 = vsel %vm1125, %v1126, %v1127
        %v1129 = vrot.slane %v1078, 1
        %v1130 = vrot.slane %v1080, 1
        %v1131 = vsel %vm1125, %v1129, %v1130
        %v1173 = vunpack.c.l.b16 %v1081
        %v1174 = vunpack.c.h.b16 %v1081
        %v1175 = vunpack.c.l.b16 %v1082
        %v1176 = vunpack.c.h.b16 %v1082
        %v1177 = vunpack.c.l.b16 %v1083
        %v1178 = vunpack.c.h.b16 %v1083
        %v1179 = vunpack.c.l.b16 %v1084
        %v1180 = vunpack.c.h.b16 %v1084
        %v1181 = vunpack.c.l.b16 %v1085
        %v1182 = vunpack.c.h.b16 %v1085
        %v1183 = vunpack.c.l.b16 %v1086
        %v1184 = vunpack.c.h.b16 %v1086
        %v1185 = vunpack.c.l.b16 %v1087
        %v1186 = vunpack.c.h.b16 %v1087
        %v1187 = vunpack.c.l.b16 %v1088
        %v1188 = vunpack.c.h.b16 %v1088
        %v1189 = vunpack.c.l.b16 %v1089
        %v1190 = vunpack.c.h.b16 %v1089
        %v1191 = vunpack.c.l.b16 %v1090
        %v1192 = vunpack.c.h.b16 %v1090
        %v1193 = vunpack.c.l.b16 %v1091
        %v1194 = vunpack.c.h.b16 %v1091
        %v1195 = vunpack.c.l.b16 %v1092
        %v1196 = vunpack.c.h.b16 %v1092
        %v1197 = vunpack.c.l.b16 %v1093
        %v1198 = vunpack.c.h.b16 %v1093
        %v1199 = vunpack.c.l.b16 %v1094
        %v1200 = vunpack.c.h.b16 %v1094
        %v1201 = vunpack.c.l.b16 %v1095
        %v1202 = vunpack.c.h.b16 %v1095
        %v1203 = vunpack.c.l.b16 %v1096
        %v1204 = vunpack.c.h.b16 %v1096
        %v1205 = vunpack.c.l.b16 %v1097
        %v1206 = vunpack.c.h.b16 %v1097
        %v1207 = vunpack.c.l.b16 %v1098
        %v1208 = vunpack.c.h.b16 %v1098
        %v1209 = vunpack.c.l.b16 %v1099
        %v1210 = vunpack.c.h.b16 %v1099
        %v1211 = vunpack.c.l.b16 %v1100
        %v1212 = vunpack.c.h.b16 %v1100
        %v1213 = vunpack.c.l.b16 %v1101
        %v1214 = vunpack.c.h.b16 %v1101
        %v1215 = vunpack.c.l.b16 %v1102
        %v1216 = vunpack.c.h.b16 %v1102
        %v1217 = vunpack.c.l.b16 %v1103
        %v1218 = vunpack.c.h.b16 %v1103
        %v1219 = vunpack.c.l.b16 %v1104
        %v1220 = vunpack.c.h.b16 %v1104
        %v1221 = vunpack.c.l.b16 %v1105
        %v1222 = vunpack.c.h.b16 %v1105
        %v1223 = vunpack.c.l.b16 %v1106
        %v1224 = vunpack.c.h.b16 %v1106
        %v1225 = vunpack.c.l.b16 %v1107
        %v1226 = vunpack.c.h.b16 %v1107
        %v1227 = vunpack.c.l.b16 %v1108
        %v1228 = vunpack.c.h.b16 %v1108
        %v1229 = vunpack.c.l.b16 %v1109
        %v1230 = vunpack.c.h.b16 %v1109
        %v1231 = vunpack.c.l.b16 %v1110
        %v1232 = vunpack.c.h.b16 %v1110
        %v1233 = vunpack.c.l.b16 %v1111
        %v1234 = vunpack.c.h.b16 %v1111
        %v1235 = vunpack.c.l.b16 %v1112
        %v1236 = vunpack.c.h.b16 %v1112
        %v1237 = vunpack.c.l.b16 %v1113
        %v1238 = vunpack.c.h.b16 %v1113
        %v1239 = vunpack.c.l.b16 %v1114
        %v1240 = vunpack.c.h.b16 %v1114
        %v1241 = vunpack.c.l.b16 %v1115
        %v1242 = vunpack.c.h.b16 %v1115
        %v1243 = vunpack.c.l.b16 %v1116
        %v1244 = vunpack.c.h.b16 %v1116
        %v1245 = vunpack.c.l.b16 %v1117
        %v1246 = vunpack.c.h.b16 %v1117
        %v1247 = vunpack.c.l.b16 %v1118
        %v1248 = vunpack.c.h.b16 %v1118
        %v1249 = vunpack.c.l.b16 %v1119
        %v1250 = vunpack.c.h.b16 %v1119
        %v1251 = vunpack.c.l.b16 %v1120
        %v1252 = vunpack.c.h.b16 %v1120
        %v1253 = vpack.c.b16 %v1177, %v1173
        %v1254 = vpack.c.b16 %v1178, %v1174
        %v1255 = vpack.c.b16 %v1179, %v1175
        %v1256 = vpack.c.b16 %v1180, %v1176
        %v1257 = vpack.c.b16 %v1185, %v1181
        %v1258 = vpack.c.b16 %v1186, %v1182
        %v1259 = vpack.c.b16 %v1187, %v1183
        %v1260 = vpack.c.b16 %v1188, %v1184
        %v1261 = vpack.c.b16 %v1193, %v1189
        %v1262 = vpack.c.b16 %v1194, %v1190
        %v1263 = vpack.c.b16 %v1195, %v1191
        %v1264 = vpack.c.b16 %v1196, %v1192
        %v1265 = vpack.c.b16 %v1201, %v1197
        %v1266 = vpack.c.b16 %v1202, %v1198
        %v1267 = vpack.c.b16 %v1203, %v1199
        %v1268 = vpack.c.b16 %v1204, %v1200
        %v1269 = vpack.c.b16 %v1209, %v1205
        %v1270 = vpack.c.b16 %v1210, %v1206
        %v1271 = vpack.c.b16 %v1211, %v1207
        %v1272 = vpack.c.b16 %v1212, %v1208
        %v1273 = vpack.c.b16 %v1217, %v1213
        %v1274 = vpack.c.b16 %v1218, %v1214
        %v1275 = vpack.c.b16 %v1219, %v1215
        %v1276 = vpack.c.b16 %v1220, %v1216
        %v1277 = vpack.c.b16 %v1225, %v1221
        %v1278 = vpack.c.b16 %v1226, %v1222
        %v1279 = vpack.c.b16 %v1227, %v1223
        %v1280 = vpack.c.b16 %v1228, %v1224
        %v1281 = vpack.c.b16 %v1233, %v1229
        %v1282 = vpack.c.b16 %v1234, %v1230
        %v1283 = vpack.c.b16 %v1235, %v1231
        %v1284 = vpack.c.b16 %v1236, %v1232
        %v1285 = vpack.c.b16 %v1241, %v1237
        %v1286 = vpack.c.b16 %v1242, %v1238
        %v1287 = vpack.c.b16 %v1243, %v1239
        %v1288 = vpack.c.b16 %v1244, %v1240
        %v1289 = vpack.c.b16 %v1249, %v1245
        %v1290 = vpack.c.b16 %v1250, %v1246
        %v1291 = vpack.c.b16 %v1251, %v1247
        %v1292 = vpack.c.b16 %v1252, %v1248
        %v1334 = vsel %vm363, %v1131, 0
        %1336 = vmatprep.subr.bf16.mxu0 %v1254
        %1337 = vmatpush1.bf16.msra.mxu0 %v1253
        %1338 = vmatprep.subr.bf16.mxu0 %v1258
        %1339 = vmatpush1.bf16.msra.mxu0 %v1257
        %1340 = vmatprep.subr.bf16.mxu0 %v1262
        %1341 = vmatpush1.bf16.msra.mxu0 %v1261
        %1342 = vmatprep.subr.bf16.mxu0 %v1266
        %1343 = vmatpush1.bf16.msra.mxu0 %v1265
        %1344 = vmatprep.subr.bf16.mxu0 %v1270
        %1345 = vmatpush1.bf16.msra.mxu0 %v1269
        %1346 = vmatprep.subr.bf16.mxu0 %v1274
        %1347 = vmatpush1.bf16.msra.mxu0 %v1273
        %1348 = vmatprep.subr.bf16.mxu0 %v1278
        %1349 = vmatpush1.bf16.msra.mxu0 %v1277
        %1350 = vmatprep.subr.bf16.mxu0 %v1282
        %1351 = vmatpush1.bf16.msra.mxu0 %v1281
        %1352 = vmatprep.subr.bf16.mxu0 %v1286
        %1353 = vmatpush1.bf16.msra.mxu0 %v1285
        %1354 = vmatprep.subr.bf16.mxu0 %v1290
        %1355 = vmatpush1.bf16.msra.mxu0 %v1289
        %1356 = vmatprep.subr.bf16.mxu0 0
        %1357 = vmatpush1.bf16.msra.mxu0 0
        %1358 = vmatprep.subr.bf16.mxu0 0
        %1359 = vmatpush1.bf16.msra.mxu0 0
        %1360 = vmatprep.subr.bf16.mxu0 0
        %1361 = vmatpush1.bf16.msra.mxu0 0
        %1362 = vmatprep.subr.bf16.mxu0 0
        %1363 = vmatpush1.bf16.msra.mxu0 0
        %1364 = vmatprep.subr.bf16.mxu0 0
        %1365 = vmatpush1.bf16.msra.mxu0 0
        %1366 = vmatprep.subr.bf16.mxu0 0
        %1367 = vmatpush1.bf16.msra.mxu0 0
        %1368 = vmatprep.mubr.bf16.mxu0 %v1334
        %1369 = vmatmul.mubr.bf16.gmra.mrb[0].mxu0 %v1128
        %v1370 = vpop.f32.mrb[0].mxu0
        %v1371 = vadd.f32 0.0, %v1370
        %v1372 = vpop.f32.mrb[0].mxu0
        %v1373 = vadd.f32 0.0, %v1372
        %v1374 = vpop.f32.mrb[0].mxu0
        %v1375 = vadd.f32 0.0, %v1374
        %v1376 = vpop.f32.mrb[0].mxu0
        %v1377 = vadd.f32 0.0, %v1376
        %1378 = vdwg.mxu0
        %1379 = vmatprep.subr.bf16.mxu0 %v1256
        %1380 = vmatpush1.bf16.msra.mxu0 %v1255
        %1381 = vmatprep.subr.bf16.mxu0 %v1260
        %1382 = vmatpush1.bf16.msra.mxu0 %v1259
        %1383 = vmatprep.subr.bf16.mxu0 %v1264
        %1384 = vmatpush1.bf16.msra.mxu0 %v1263
        %1385 = vmatprep.subr.bf16.mxu0 %v1268
        %1386 = vmatpush1.bf16.msra.mxu0 %v1267
        %1387 = vmatprep.subr.bf16.mxu0 %v1272
        %1388 = vmatpush1.bf16.msra.mxu0 %v1271
        %1389 = vmatprep.subr.bf16.mxu0 %v1276
        %1390 = vmatpush1.bf16.msra.mxu0 %v1275
        %1391 = vmatprep.subr.bf16.mxu0 %v1280
        %1392 = vmatpush1.bf16.msra.mxu0 %v1279
        %1393 = vmatprep.subr.bf16.mxu0 %v1284
        %1394 = vmatpush1.bf16.msra.mxu0 %v1283
        %1395 = vmatprep.subr.bf16.mxu0 %v1288
        %1396 = vmatpush1.bf16.msra.mxu0 %v1287
        %1397 = vmatprep.subr.bf16.mxu0 %v1292
        %1398 = vmatpush1.bf16.msra.mxu0 %v1291
        %1399 = vmatprep.subr.bf16.mxu0 0
        %1400 = vmatpush1.bf16.msra.mxu0 0
        %1401 = vmatprep.subr.bf16.mxu0 0
        %1402 = vmatpush1.bf16.msra.mxu0 0
        %1403 = vmatprep.subr.bf16.mxu0 0
        %1404 = vmatpush1.bf16.msra.mxu0 0
        %1405 = vmatprep.subr.bf16.mxu0 0
        %1406 = vmatpush1.bf16.msra.mxu0 0
        %1407 = vmatprep.subr.bf16.mxu0 0
        %1408 = vmatpush1.bf16.msra.mxu0 0
        %1409 = vmatprep.subr.bf16.mxu0 0
        %1410 = vmatpush1.bf16.msra.mxu0 0
        %1411 = vmatprep.mubr.bf16.mxu0 %v1334
        %1412 = vmatmul.mubr.bf16.gmra.mrb[0].mxu0 %v1128
        %v1413 = vpop.f32.mrb[0].mxu0
        %v1414 = vadd.f32 0.0, %v1413
        %v1415 = vpop.f32.mrb[0].mxu0
        %v1416 = vadd.f32 0.0, %v1415
        %v1417 = vpop.f32.mrb[0].mxu0
        %v1418 = vadd.f32 0.0, %v1417
        %v1419 = vpop.f32.mrb[0].mxu0
        %v1420 = vadd.f32 0.0, %v1419
        %1421 = vdwg.mxu0
        %v1422 = vadd.f32 %v1022, %v1371
        %v1423 = vadd.f32 %v1024, %v1373
        %v1424 = vadd.f32 %v1065, %v1414
        %v1425 = vadd.f32 %v1067, %v1416
        %v1426 = vadd.f32 %v1026, %v1375
        %v1427 = vadd.f32 %v1028, %v1377
        %v1428 = vadd.f32 %v1069, %v1418
        %v1429 = vadd.f32 %v1071, %v1420
        %v1430 = vmul.f32 %v1422, %v1422
        %v1431 = vmul.f32 %v1423, %v1423
        %v1432 = vmul.f32 %v1426, %v1426
        %v1433 = vmul.f32 %v1427, %v1427
        %v1434 = vmul.f32 %v1424, %v1424
        %v1435 = vmul.f32 %v1425, %v1425
        %v1436 = vmul.f32 %v1428, %v1428
        %v1437 = vmul.f32 %v1429, %v1429
        %v1438 = vadd.f32 %v1430, %v1434
        %v1439 = vadd.f32 %v1431, %v1435
        %v1440 = vadd.f32 %v1432, %v1436
        %v1441 = vadd.f32 %v1433, %v1437
        %v1442 = vrsqrt.pop %v1438
        %v1443 = vmul.f32 %v1438, %v1442
        %vm1444 = vcmp.eq.f32.partialorder %v1438, inf
        %v1445 = vsel %vm1444, %v1438, %v1443
        %vm1446 = vcmp.eq.f32.partialorder %v1438, 0.0
        %v1447 = vand.u32 %v1438, 2147483648
        %v1448 = vsel %vm1446, %v1447, %v1445
        %v1449 = vrsqrt.pop %v1439
        %v1450 = vmul.f32 %v1439, %v1449
        %vm1451 = vcmp.eq.f32.partialorder %v1439, inf
        %v1452 = vsel %vm1451, %v1439, %v1450
        %vm1453 = vcmp.eq.f32.partialorder %v1439, 0.0
        %v1454 = vand.u32 %v1439, 2147483648
        %v1455 = vsel %vm1453, %v1454, %v1452
        %v1456 = vrsqrt.pop %v1440
        %v1457 = vmul.f32 %v1440, %v1456
        %vm1458 = vcmp.eq.f32.partialorder %v1440, inf
        %v1459 = vsel %vm1458, %v1440, %v1457
        %vm1460 = vcmp.eq.f32.partialorder %v1440, 0.0
        %v1461 = vand.u32 %v1440, 2147483648
        %v1462 = vsel %vm1460, %v1461, %v1459
        %v1463 = vrsqrt.pop %v1441
        %v1464 = vmul.f32 %v1441, %v1463
        %vm1465 = vcmp.eq.f32.partialorder %v1441, inf
        %v1466 = vsel %vm1465, %v1441, %v1464
        %vm1467 = vcmp.eq.f32.partialorder %v1441, 0.0
        %v1468 = vand.u32 %v1441, 2147483648
        %v1469 = vsel %vm1467, %v1468, %v1466
        %v1470 = vpack.c.bf16 %v1462, %v1448
        %v1471 = vpack.c.bf16 %v1469, %v1455
        %v1472 = vld [vmem:[#allocation9] sm:$0xf]
        %v1473 = vld [vmem:[#allocation9 + $0x4] sm:$0xf]
        %v1474 = vld [vmem:[#allocation9 + $0x8] sm:$0xf]
        %v1475 = vld [vmem:[#allocation9 + $0xc] sm:$0xf]
        %v1476 = vld [vmem:[#allocation9 + $0x10] sm:$0xf]
        %v1477 = vld [vmem:[#allocation9 + $0x14] sm:$0xf]
        %v1478 = vld [vmem:[#allocation9 + $0x18] sm:$0xf]
        %v1479 = vld [vmem:[#allocation9 + $0x1c] sm:$0xf]
        %v1480 = vld [vmem:[#allocation9 + $0x20] sm:$0xf]
        %v1481 = vld [vmem:[#allocation9 + $0x24] sm:$0xf]
        %v1482 = vld [vmem:[#allocation9 + $0x28] sm:$0xf]
        %v1483 = vld [vmem:[#allocation9 + $0x2c] sm:$0xf]
        %v1484 = vld [vmem:[#allocation9 + $0x30] sm:$0xf]
        %v1485 = vld [vmem:[#allocation9 + $0x34] sm:$0xf]
        %v1486 = vld [vmem:[#allocation9 + $0x38] sm:$0xf]
        %v1487 = vld [vmem:[#allocation9 + $0x3c] sm:$0xf]
        %v1488 = vld [vmem:[#allocation9 + $0x40] sm:$0xf]
        %v1489 = vld [vmem:[#allocation9 + $0x44] sm:$0xf]
        %v1490 = vld [vmem:[#allocation9 + $0x48] sm:$0xf]
        %v1491 = vld [vmem:[#allocation9 + $0x4c] sm:$0xf]
        %v1492 = vld [vmem:[#allocation9 + $0x50] sm:$0xf]
        %v1493 = vld [vmem:[#allocation9 + $0x54] sm:$0xf]
        %v1494 = vld [vmem:[#allocation9 + $0x58] sm:$0xf]
        %v1495 = vld [vmem:[#allocation9 + $0x5c] sm:$0xf]
        %v1496 = vld [vmem:[#allocation9 + $0x60] sm:$0xf]
        %v1497 = vld [vmem:[#allocation9 + $0x64] sm:$0xf]
        %v1498 = vld [vmem:[#allocation9 + $0x68] sm:$0xf]
        %v1499 = vld [vmem:[#allocation9 + $0x6c] sm:$0xf]
        %v1500 = vld [vmem:[#allocation9 + $0x70] sm:$0xf]
        %v1501 = vld [vmem:[#allocation9 + $0x74] sm:$0xf]
        %v1502 = vld [vmem:[#allocation9 + $0x78] sm:$0xf]
        %v1503 = vld [vmem:[#allocation9 + $0x7c] sm:$0xf]
        %v1536 = vunpack.c.l.b16 %v1472
        %v1537 = vunpack.c.l.b16 %v1473
        %v1538 = vunpack.c.l.b16 %v1474
        %v1539 = vunpack.c.l.b16 %v1475
        %v1540 = vunpack.c.l.b16 %v1476
        %v1541 = vunpack.c.l.b16 %v1477
        %v1542 = vunpack.c.l.b16 %v1478
        %v1543 = vunpack.c.l.b16 %v1479
        %v1544 = vunpack.c.l.b16 %v1480
        %v1545 = vunpack.c.l.b16 %v1481
        %v1546 = vunpack.c.l.b16 %v1482
        %v1547 = vunpack.c.l.b16 %v1483
        %v1548 = vunpack.c.l.b16 %v1484
        %v1549 = vunpack.c.l.b16 %v1485
        %v1550 = vunpack.c.l.b16 %v1486
        %v1551 = vunpack.c.l.b16 %v1487
        %v1552 = vunpack.c.l.b16 %v1488
        %v1553 = vunpack.c.l.b16 %v1489
        %v1554 = vunpack.c.l.b16 %v1490
        %v1555 = vunpack.c.l.b16 %v1491
        %v1556 = vunpack.c.l.b16 %v1492
        %v1557 = vunpack.c.l.b16 %v1493
        %v1558 = vunpack.c.l.b16 %v1494
        %v1559 = vunpack.c.l.b16 %v1495
        %v1560 = vunpack.c.l.b16 %v1496
        %v1561 = vunpack.c.l.b16 %v1497
        %v1562 = vunpack.c.l.b16 %v1498
        %v1563 = vunpack.c.l.b16 %v1499
        %v1564 = vunpack.c.l.b16 %v1500
        %v1565 = vunpack.c.l.b16 %v1501
        %v1566 = vunpack.c.l.b16 %v1502
        %v1567 = vunpack.c.l.b16 %v1503
        %v1568 = vpack.c.b16 %v1537, %v1536
        %v1569 = vpack.c.b16 %v1539, %v1538
        %v1570 = vpack.c.b16 %v1541, %v1540
        %v1571 = vpack.c.b16 %v1543, %v1542
        %v1572 = vpack.c.b16 %v1545, %v1544
        %v1573 = vpack.c.b16 %v1547, %v1546
        %v1574 = vpack.c.b16 %v1549, %v1548
        %v1575 = vpack.c.b16 %v1551, %v1550
        %v1576 = vpack.c.b16 %v1553, %v1552
        %v1577 = vpack.c.b16 %v1555, %v1554
        %v1578 = vpack.c.b16 %v1557, %v1556
        %v1579 = vpack.c.b16 %v1559, %v1558
        %v1580 = vpack.c.b16 %v1561, %v1560
        %v1581 = vpack.c.b16 %v1563, %v1562
        %v1582 = vpack.c.b16 %v1565, %v1564
        %v1583 = vpack.c.b16 %v1567, %v1566
        %1600 = vmatprep.subr.bf16.mxu0 0
        %1601 = vmatpush1.bf16.msra.mxu0 %v1568
        %1602 = vmatprep.subr.bf16.mxu0 0
        %1603 = vmatpush1.bf16.msra.mxu0 %v1569
        %1604 = vmatprep.subr.bf16.mxu0 0
        %1605 = vmatpush1.bf16.msra.mxu0 %v1570
        %1606 = vmatprep.subr.bf16.mxu0 0
        %1607 = vmatpush1.bf16.msra.mxu0 %v1571
        %1608 = vmatprep.subr.bf16.mxu0 0
        %1609 = vmatpush1.bf16.msra.mxu0 %v1572
        %1610 = vmatprep.subr.bf16.mxu0 0
        %1611 = vmatpush1.bf16.msra.mxu0 %v1573
        %1612 = vmatprep.subr.bf16.mxu0 0
        %1613 = vmatpush1.bf16.msra.mxu0 %v1574
        %1614 = vmatprep.subr.bf16.mxu0 0
        %1615 = vmatpush1.bf16.msra.mxu0 %v1575
        %1616 = vmatprep.subr.bf16.mxu0 0
        %1617 = vmatpush1.bf16.msra.mxu0 %v1576
        %1618 = vmatprep.subr.bf16.mxu0 0
        %1619 = vmatpush1.bf16.msra.mxu0 %v1577
        %1620 = vmatprep.subr.bf16.mxu0 0
        %1621 = vmatpush1.bf16.msra.mxu0 %v1578
        %1622 = vmatprep.subr.bf16.mxu0 0
        %1623 = vmatpush1.bf16.msra.mxu0 %v1579
        %1624 = vmatprep.subr.bf16.mxu0 0
        %1625 = vmatpush1.bf16.msra.mxu0 %v1580
        %1626 = vmatprep.subr.bf16.mxu0 0
        %1627 = vmatpush1.bf16.msra.mxu0 %v1581
        %1628 = vmatprep.subr.bf16.mxu0 0
        %1629 = vmatpush1.bf16.msra.mxu0 %v1582
        %1630 = vmatprep.subr.bf16.mxu0 0
        %1631 = vmatpush1.bf16.msra.mxu0 %v1583
        %1632 = vmatprep.mubr.bf16.mxu0 %v1471
        %1633 = vmatmul.mubr.bf16.gmra.mrb[0].mxu0 %v1470
        %v1634 = vpop.f32.mrb[0].mxu0
        %v1635 = vadd.f32 1e-20, %v1634
        %v1636 = vpop.f32.mrb[0].mxu0
        %v1637 = vpop.f32.mrb[0].mxu0
        %v1638 = vadd.f32 1e-20, %v1637
        %v1639 = vpop.f32.mrb[0].mxu0
        %1640 = vdwg.mxu0
        %v1641 = vlog2.pop %v1635
        %v1642 = vmul.f32 %v1641, 0.6931472
        %v1643 = vlog2.pop %v1638
        %v1644 = vmul.f32 %v1643, 0.6931472
        %v1645 = vld [vmem:[#allocation11] sm:$0xff]
        %v1646 = vld [vmem:[#allocation11 + $0x8] sm:$0xff]
        %v1647 = vld [vmem:[#allocation11 + $0x10] sm:$0xff]
        %v1648 = vld [vmem:[#allocation11 + $0x18] sm:$0xff]
        %v1649 = vld [vmem:[#allocation11 + $0x20] sm:$0xff]
        %v1650 = vld [vmem:[#allocation11 + $0x28] sm:$0xff]
        %v1651 = vld [vmem:[#allocation11 + $0x30] sm:$0xff]
        %v1652 = vld [vmem:[#allocation11 + $0x38] sm:$0xff]
        %v1653 = vld [vmem:[#allocation11 + $0x40] sm:$0xff]
        %v1654 = vld [vmem:[#allocation11 + $0x48] sm:$0xff]
        %v1655 = vld [vmem:[#allocation11 + $0x50] sm:$0xff]
        %v1656 = vld [vmem:[#allocation11 + $0x58] sm:$0xff]
        %v1657 = vld [vmem:[#allocation11 + $0x60] sm:$0xff]
        %v1658 = vld [vmem:[#allocation11 + $0x68] sm:$0xff]
        %v1659 = vld [vmem:[#allocation11 + $0x70] sm:$0xff]
        %v1660 = vld [vmem:[#allocation11 + $0x78] sm:$0xff]
        %1661 = vmatprep.subr.mxu0 0.0
        %1662 = vmatpush1.msra.mxu0 %v1645
        %1663 = vmatprep.subr.mxu0 0.0
        %1664 = vmatpush1.msra.mxu0 %v1646
        %1665 = vmatprep.subr.mxu0 0.0
        %1666 = vmatpush1.msra.mxu0 %v1647
        %1667 = vmatprep.subr.mxu0 0.0
        %1668 = vmatpush1.msra.mxu0 %v1648
        %1669 = vmatprep.subr.mxu0 0.0
        %1670 = vmatpush1.msra.mxu0 %v1649
        %1671 = vmatprep.subr.mxu0 0.0
        %1672 = vmatpush1.msra.mxu0 %v1650
        %1673 = vmatprep.subr.mxu0 0.0
        %1674 = vmatpush1.msra.mxu0 %v1651
        %1675 = vmatprep.subr.mxu0 0.0
        %1676 = vmatpush1.msra.mxu0 %v1652
        %1677 = vmatprep.subr.mxu0 0.0
        %1678 = vmatpush1.msra.mxu0 %v1653
        %1679 = vmatprep.subr.mxu0 0.0
        %1680 = vmatpush1.msra.mxu0 %v1654
        %1681 = vmatprep.subr.mxu0 0.0
        %1682 = vmatpush1.msra.mxu0 %v1655
        %1683 = vmatprep.subr.mxu0 0.0
        %1684 = vmatpush1.msra.mxu0 %v1656
        %1685 = vmatprep.subr.mxu0 0.0
        %1686 = vmatpush1.msra.mxu0 %v1657
        %1687 = vmatprep.subr.mxu0 0.0
        %1688 = vmatpush1.msra.mxu0 %v1658
        %1689 = vmatprep.subr.mxu0 0.0
        %1690 = vmatpush1.msra.mxu0 %v1659
        %1691 = vmatprep.subr.mxu0 0.0
        %1692 = vmatpush1.msra.mxu0 %v1660
        %1693 = vmatprep.subr.mxu0 0.0
        %1694 = vmatpush1.msra.mxu0 0.0
        %1695 = vmatprep.subr.mxu0 0.0
        %1696 = vmatpush1.msra.mxu0 0.0
        %1697 = vmatprep.subr.mxu0 0.0
        %1698 = vmatpush1.msra.mxu0 0.0
        %1699 = vmatprep.subr.mxu0 0.0
        %1700 = vmatpush1.msra.mxu0 0.0
        %1701 = vmatprep.subr.mxu0 0.0
        %1702 = vmatpush1.msra.mxu0 0.0
        %1703 = vmatprep.subr.mxu0 0.0
        %1704 = vmatpush1.msra.mxu0 0.0
        %1705 = vmatprep.subr.mxu0 0.0
        %1706 = vmatpush1.msra.mxu0 0.0
        %1707 = vmatprep.subr.mxu0 0.0
        %1708 = vmatpush1.msra.mxu0 0.0
        %1709 = vmatprep.subr.mxu0 0.0
        %1710 = vmatpush1.msra.mxu0 0.0
        %1711 = vmatprep.subr.mxu0 0.0
        %1712 = vmatpush1.msra.mxu0 0.0
        %1713 = vmatprep.subr.mxu0 0.0
        %1714 = vmatpush1.msra.mxu0 0.0
        %1715 = vmatprep.subr.mxu0 0.0
        %1716 = vmatpush1.msra.mxu0 0.0
        %1717 = vmatprep.subr.mxu0 0.0
        %1718 = vmatpush1.msra.mxu0 0.0
        %1719 = vmatprep.subr.mxu0 0.0
        %1720 = vmatpush1.msra.mxu0 0.0
        %1721 = vmatprep.subr.mxu0 0.0
        %1722 = vmatpush1.msra.mxu0 0.0
        %1723 = vmatprep.subr.mxu0 0.0
        %1724 = vmatpush1.msra.mxu0 0.0
        %1725 = vmatprep.mubr.f32.mxu0 0.0
        %1726 = vmatmul.mubr.f32.gmra.mrb[0].mxu0 %v1642
        %v1727 = vpop.f32.mrb[0].mxu0
        %v1728 = vadd.f32 0.0, %v1727
        %v1729 = vpop.f32.mrb[0].mxu0
        %1730 = vmatprep.mubr.f32.mxu0 0.0
        %1731 = vmatmul.mubr.f32.gmra.mrb[0].mxu0 %v1644
        %v1732 = vpop.f32.mrb[0].mxu0
        %v1733 = vadd.f32 0.0, %v1732
        %v1734 = vpop.f32.mrb[0].mxu0
        %1735 = vdwg.mxu0
        %1736 = vst [vmem:[%s352] sm:$0xff] %v1728
        %1737 = vst [vmem:[%s352 + $0x8] sm:$0xff] %v1733
        %s1738 = sand.u32 %s169, 1
        %s1739 = scalar_lea.sflag [#allocation5], %s1738
        %s1740 = sand.u32 %s169, 1
        %s1741 = smul.addr %s1740, 16
        %s1742 = scalar_lea.vmem [#allocation12], %s1741
        // Predicated region
        $region61: #{tpu_custom_call.1} parent=39 // pred_check
          %p1743 = pneg %p179
        $region62: #{tpu_custom_call.1} parent=39 // pred_check_branch
          %1745 = sbr.rel (%p1743) target = $region64
        $region63: #{tpu_custom_call.1} parent=39 // pred_region
          %s1746 = smul.u32 2, %s31
          %s1748 = ssub.s32 256, 256
          %1749 = vsyncadd %s1739, %s1748
          %s1750 = smul.addr %s30, 2
          %s1751 = sadd.s32 %s1746, %s1750
          %s1752 = smul.addr %s1751, 128
          %s1753 = scalar_lea.hbm %s5, %s1752
          %s1754 = sshll.u32 %s1742, 4
          %s1755 = int_to_ptr.vmem [resolvable:$true] %s1754
          %1760 = dma.vmem_to_hbm [thread:$0]  %s1755, 256, %s1753, %s1739, 128, 128, 8
        $region64: #{tpu_custom_call.1} parent=39 // pred_fallthru
          _
      $region40: #{tpu_custom_call.1} parent=5 // pred_fallthru
        _
      %p1761 = scmp.le.s32.totalorder 2, %s21
      // Predicated region
      $region65: #{tpu_custom_call.1} parent=5 // pred_check
        %p1762 = pneg %p1761
      $region66: #{tpu_custom_call.1} parent=5 // pred_check_branch
        %1764 = sbr.rel (%p1762) target = $region68
      $region67: #{tpu_custom_call.1} parent=5 // pred_region
        %s1765 = ssub.s32 %s21, 2
        // Predicated region
        $region69: #{tpu_custom_call.1} parent=67 // pred_check
          %p1766 = pneg %p185
        $region70: #{tpu_custom_call.1} parent=67 // pred_check_branch
          %1768 = sbr.rel (%p1766) target = $region72
        $region71: #{tpu_custom_call.1} parent=67 // pred_region
          %s1769 = sand.u32 %s170, 1
          %s1770 = scalar_lea.sflag [#allocation5], %s1769
          %s1771 = sand.u32 %s170, 1
          %s1772 = smul.addr %s1771, 16
          %s1773 = scalar_lea.vmem [#allocation12], %s1772
          %1774 = dma.done %s1770, 256
        $region72: #{tpu_custom_call.1} parent=67 // pred_fallthru
          _
      $region68: #{tpu_custom_call.1} parent=5 // pred_fallthru
        _
    $region6: #{tpu_custom_call.1} parent=1 // loop_footer
      %s25 = sadd.s32 1, %s21
    $region7: #{tpu_custom_call.1} parent=1 // loop_footer_branch
      %20 = sbr.rel target = $region3
    $region8: #{tpu_custom_call.1} parent=1 // loop_exit
      _
    %1775 = vsyncpa [#allocation4], 1
    %s1776 = scalar_lea.sflag [#allocation4], 1
    %1777 = vsyncpa %s1776, 1
    %1778 = vsyncpa [#allocation7], 1
    %s1779 = scalar_lea.sflag [#allocation7], 1
    %1780 = vsyncpa %s1779, 1
    %1781 = vsyncpa [#allocation10], 1
    %1782 = vsyncpa [#allocation5], 1
    %s1783 = scalar_lea.sflag [#allocation5], 1
    %1784 = vsyncpa %s1783, 1

</llo_original>
